<compile_context>
chip_gen: v6e
topology: v6e:2x2x1
jax: 0.10.0
libtpu: 0.0.40
codegen_flags: <defaults>
</compile_context>

<pallas_src>
import math

import jax
import jax.numpy as jnp
from jax.experimental import pallas as pl
from jax.experimental.pallas import tpu as pltpu

# ---------------- model dims (small synthetic config) ----------------
B = 2         # batch
S = 8         # sequence length
H = 32        # hidden size (logical)
NH = 2        # attention heads
HD = H // NH  # head dim (16)
I = 64        # FFN intermediate (logical)
C = 5         # n_classes (logical)
V = 100       # vocab size

HP = 128      # lane-padded hidden
IP = 128      # lane-padded FFN intermediate
CP = 128      # lane-padded classifier width
HDP = 128     # lane-padded per-head dim
BS = B * S    # flattened rows (16)
NSMALL = 16   # rows in the small-parameter pack (15 used, padded to 16)

# fused weight slab column offsets: [Q_h0|Q_h1|K_h0|K_h1|V_h0|V_h1|w1|w2|wp|wout]
_QKV_COLS = 3 * NH * HDP       # 768
_W1_OFF = _QKV_COLS            # 768
_W2_OFF = _W1_OFF + IP         # 896
_WP_OFF = _W2_OFF + HP         # 1024
_WOUT_OFF = _WP_OFF + HP       # 1152
_WFUSE_COLS = _WOUT_OFF + CP   # 1280

# small-parameter pack row indices
_BQ0 = 0                 # NH rows of per-head (pre-scaled) q bias
_BK0 = NH                # NH rows of per-head k bias
_BV0 = 2 * NH            # NH rows of per-head v bias
_BO = 3 * NH             # 6
_LN1G, _LN1B, _B1, _B2, _LN2G, _LN2B, _BP, _BOUT = 7, 8, 9, 10, 11, 12, 13, 14


def _masked_layernorm(h, gamma, beta, lane_mask, eps=1e-12):
    # h is zero in the padded lanes; statistics are over the logical H lanes only.
    mu = jnp.sum(h, axis=-1, keepdims=True) * (1.0 / H)
    centered = (h - mu) * lane_mask
    var = jnp.sum(centered * centered, axis=-1, keepdims=True) * (1.0 / H)
    return (h - mu) * jax.lax.rsqrt(var + eps) * gamma + beta


def _classifier_kernel(x_ref, bias_ref, wfuse_ref, wo_ref, small_ref, out_ref):
    f32 = jnp.float32
    bf16 = jnp.bfloat16

    x = x_ref[...]                       # [BS, HP] f32, padded lanes zero
    small = small_ref[...]               # [NSMALL, HP] f32
    attn_bias = bias_ref[:, :BS]         # [BS, BS] f32 (block-diag batch + key padding)

    bo   = small[_BO:_BO + 1]
    ln1g = small[_LN1G:_LN1G + 1]
    ln1b = small[_LN1B:_LN1B + 1]
    b1   = small[_B1:_B1 + 1]
    b2   = small[_B2:_B2 + 1]
    ln2g = small[_LN2G:_LN2G + 1]
    ln2b = small[_LN2B:_LN2B + 1]
    bp   = small[_BP:_BP + 1]
    bout = small[_BOUT:_BOUT + 1]

    lane = jax.lax.broadcasted_iota(jnp.int32, (1, HP), 1)
    lane_mask = (lane < H).astype(f32)

    # ---- fused, per-head lane-padded QKV projection (one wide MXU push) ----
    wqkv = wfuse_ref[:, :_QKV_COLS]                                       # [HP, 768] bf16
    qkv = jnp.dot(x.astype(bf16), wqkv, preferred_element_type=f32)       # [BS, 768] f32

    # ---- self-attention, batched over batch via block-diagonal bias ----
    ctx_heads = []
    for h in range(NH):
        q_h = qkv[:, h * HDP:(h + 1) * HDP] + small[_BQ0 + h:_BQ0 + h + 1]          # [BS,128]
        k_h = qkv[:, (NH + h) * HDP:(NH + h + 1) * HDP] + small[_BK0 + h:_BK0 + h + 1]
        v_h = qkv[:, (2 * NH + h) * HDP:(2 * NH + h + 1) * HDP] + small[_BV0 + h:_BV0 + h + 1]

        s = jax.lax.dot_general(q_h.astype(bf16), k_h.astype(bf16),
                                (((1,), (1,)), ((), ())),
                                preferred_element_type=f32)                          # [BS, BS]
        s = s + attn_bias
        m = jnp.max(s, axis=-1, keepdims=True)
        p = jnp.exp(s - m)
        denom = jnp.sum(p, axis=-1, keepdims=True)
        probs = p * pl.reciprocal(denom, approx=True)
        ctx_h = jnp.dot(probs.astype(bf16), v_h.astype(bf16),
                        preferred_element_type=f32)                                  # [BS, 128]
        ctx_heads.append(ctx_h.astype(bf16))

    ctx_all = jnp.concatenate(ctx_heads, axis=-1)                                    # [BS, NH*128]
    attn_out = jnp.dot(ctx_all, wo_ref[...], preferred_element_type=f32) + bo        # [BS, HP]

    h1 = _masked_layernorm(x + attn_out, ln1g, ln1b, lane_mask)

    # ---- feed-forward ----
    w1 = wfuse_ref[:, _W1_OFF:_W1_OFF + IP]
    w2 = wfuse_ref[:, _W2_OFF:_W2_OFF + HP]
    ff = jnp.dot(h1.astype(bf16), w1, preferred_element_type=f32) + b1
    ff = jax.nn.gelu(ff, approximate=True)   # TODO(synk): HF BERT default is exact (erf) GELU
    ff = jnp.dot(ff.astype(bf16), w2, preferred_element_type=f32) + b2
    h2 = _masked_layernorm(h1 + ff, ln2g, ln2b, lane_mask)

    # ---- pooler + classifier on ALL rows (row-local; wrapper slices the CLS rows).
    #      Keeps the output a dense [BS, 128] slab -> unmasked stores, no gather/concat.
    # ---- dropout(p=0.3): identity in eval mode.
    # TODO(synk): training-mode dropout (torch RNG) has no exact Pallas equivalent.
    wp_w = wfuse_ref[:, _WP_OFF:_WP_OFF + HP]
    wout_w = wfuse_ref[:, _WOUT_OFF:_WOUT_OFF + CP]
    pooled = jnp.tanh(jnp.dot(h2.astype(bf16), wp_w, preferred_element_type=f32) + bp)
    logits = jnp.dot(pooled.astype(bf16), wout_w, preferred_element_type=f32) + bout  # [BS, CP]
    out_ref[...] = logits


# ---------------- parameter packing (logical -> lane-padded kernel operands) ----------------
def _pad2(a, rows, cols):
    return jnp.zeros((rows, cols), jnp.float32).at[:a.shape[0], :a.shape[1]].set(a)


def pack_params(p):
    scale = 1.0 / math.sqrt(HD)

    def head_cols(w, h):                         # [H, HD] column block -> [HP, HDP]
        return _pad2(w[:, h * HD:(h + 1) * HD], HP, HDP)

    q_blocks = [head_cols(p['wq'] * scale, h) for h in range(NH)]   # scale folded into wq
    k_blocks = [head_cols(p['wk'], h) for h in range(NH)]
    v_blocks = [head_cols(p['wv'], h) for h in range(NH)]
    wfuse = jnp.concatenate(
        q_blocks + k_blocks + v_blocks +
        [_pad2(p['w1'], HP, IP), _pad2(p['w2'], IP, HP),
         _pad2(p['wp'], HP, HP), _pad2(p['wout'], HP, CP)],
        axis=1)                                                      # [HP, 1280]

    # wo packed per head: rows h*128 .. h*128+HD hold wo[h*HD:(h+1)*HD, :]
    wo_p = jnp.zeros((NH * HDP, HP), jnp.float32)
    for h in range(NH):
        wo_p = wo_p.at[h * HDP:h * HDP + HD, :H].set(p['wo'][h * HD:(h + 1) * HD, :])

    def head_bias(b, h, s=1.0):                  # [1, HD] slice -> [1, HP]
        return _pad2(b[:, h * HD:(h + 1) * HD] * s, 1, HP)

    rows = ([head_bias(p['bq'], h, scale) for h in range(NH)] +
            [head_bias(p['bk'], h) for h in range(NH)] +
            [head_bias(p['bv'], h) for h in range(NH)] +
            [_pad2(p['bo'], 1, HP),
             _pad2(p['ln1_g'], 1, HP), _pad2(p['ln1_b'], 1, HP),
             _pad2(p['b1'], 1, HP), _pad2(p['b2'], 1, HP),
             _pad2(p['ln2_g'], 1, HP), _pad2(p['ln2_b'], 1, HP),
             _pad2(p['bp'], 1, HP), _pad2(p['bout'], 1, HP)])
    small = _pad2(jnp.concatenate(rows, axis=0), NSMALL, HP)         # [16, HP]

    return {
        'tok_emb': _pad2(p['tok_emb'], V, HP),
        'pos_emb': _pad2(p['pos_emb'], S, HP),
        'wfuse': wfuse.astype(jnp.bfloat16),     # MXU operand -> bf16
        'wo_p': wo_p.astype(jnp.bfloat16),       # MXU operand -> bf16
        'small': small,                          # biases / LN params stay f32
    }


def amazon_classifier_forward(input_ids, attention_mask, packed):
    """input_ids: [B, S] int32, attention_mask: [B, S] {0,1} -> logits [B, C]."""
    # glue: embedding lookup (word + position), already lane-padded to HP
    x = packed['tok_emb'][input_ids] + packed['pos_emb'][None, :, :]      # [B, S, HP]
    x = x.reshape(BS, HP)

    # additive attention bias: block-diagonal over batch + key-padding mask,
    # packed lane-dense as [BS, 128] (only the first BS columns are used in-kernel).
    mask_f = attention_mask.astype(jnp.float32).reshape(BS)               # [BS]
    key_bias = (1.0 - mask_f) * -1e9
    batch_of = jnp.arange(BS, dtype=jnp.int32) // S
    bias16 = jnp.where(batch_of[:, None] == batch_of[None, :],
                       key_bias[None, :], jnp.float32(-1e9))              # [BS, BS]
    bias = jnp.zeros((BS, 128), jnp.float32).at[:, :BS].set(bias16)

    out = pl.pallas_call(
        _classifier_kernel,
        out_shape=jax.ShapeDtypeStruct((BS, CP), jnp.float32),
        grid_spec=pltpu.PrefetchScalarGridSpec(
            num_scalar_prefetch=0,
            grid=(1,),
            in_specs=[
                pl.BlockSpec((BS, HP),          lambda i: (0, 0)),   # activations (f32)
                pl.BlockSpec((BS, 128),         lambda i: (0, 0)),   # attention bias (f32)
                pl.BlockSpec((HP, _WFUSE_COLS), lambda i: (0, 0)),   # qkv|w1|w2|wp|wout (bf16)
                pl.BlockSpec((NH * HDP, HP),    lambda i: (0, 0)),   # per-head-packed wo (bf16)
                pl.BlockSpec((NSMALL, HP),      lambda i: (0, 0)),   # biases + LN params (f32)
            ],
            out_specs=pl.BlockSpec((BS, CP), lambda i: (0, 0)),
        ),
        compiler_params=pltpu.CompilerParams(
            dimension_semantics=("arbitrary",)),
    )(x, bias, packed['wfuse'], packed['wo_p'], packed['small'])

    # pick out the CLS (position 0) row of each batch and the logical class lanes
    return out.reshape(B, S, CP)[:, 0, :C]


# ---------------- logical-shape parameter init (same as the PyTorch-style model) ----------------
def init_params(key):
    ks = jax.random.split(key, 24)
    def w(k, shape, scale=0.02):
        return (scale * jax.random.normal(k, shape)).astype(jnp.float32)
    return {
        'tok_emb': w(ks[0], (V, H)),
        'pos_emb': w(ks[1], (S, H)),
        'wq': w(ks[2], (H, H)),  'bq': w(ks[3], (1, H)),
        'wk': w(ks[4], (H, H)),  'bk': w(ks[5], (1, H)),
        'wv': w(ks[6], (H, H)),  'bv': w(ks[7], (1, H)),
        'wo': w(ks[8], (H, H)),  'bo': w(ks[9], (1, H)),
        'ln1_g': jnp.ones((1, H), jnp.float32), 'ln1_b': jnp.zeros((1, H), jnp.float32),
        'w1': w(ks[10], (H, I)), 'b1': w(ks[11], (1, I)),
        'w2': w(ks[12], (I, H)), 'b2': w(ks[13], (1, H)),
        'ln2_g': jnp.ones((1, H), jnp.float32), 'ln2_b': jnp.zeros((1, H), jnp.float32),
        'wp': w(ks[14], (H, H)), 'bp': w(ks[15], (1, H)),
        'wout': w(ks[16], (H, C)), 'bout': w(ks[17], (1, C)),
    }


# ---------------- pure-JAX reference (logical shapes, f32) for a sanity check ----------------
def reference_forward(input_ids, attention_mask, p):
    x = p['tok_emb'][input_ids] + p['pos_emb'][None, :S, :]                        # [B,S,H]
    abias = (1.0 - attention_mask.astype(jnp.float32)) * -1e9                      # [B,S]

    def ln(h, g, b, eps=1e-12):
        mu = jnp.mean(h, axis=-1, keepdims=True)
        var = jnp.mean((h - mu) ** 2, axis=-1, keepdims=True)
        return (h - mu) * jax.lax.rsqrt(var + eps) * g + b

    q = (x @ p['wq'] + p['bq']).reshape(B, S, NH, HD)
    k = (x @ p['wk'] + p['bk']).reshape(B, S, NH, HD)
    v = (x @ p['wv'] + p['bv']).reshape(B, S, NH, HD)
    scores = jnp.einsum('bsnd,btnd->bnst', q, k) / math.sqrt(HD)
    scores = scores + abias[:, None, None, :]
    probs = jax.nn.softmax(scores, axis=-1)
    ctx = jnp.einsum('bnst,btnd->bsnd', probs, v).reshape(B, S, H)
    h1 = ln(x + ctx @ p['wo'] + p['bo'], p['ln1_g'], p['ln1_b'])
    ff = jax.nn.gelu(h1 @ p['w1'] + p['b1'], approximate=True)
    h2 = ln(h1 + ff @ p['w2'] + p['b2'], p['ln2_g'], p['ln2_b'])
    pooled = jnp.tanh(h2[:, 0, :] @ p['wp'] + p['bp'])
    return pooled @ p['wout'] + p['bout']


if __name__ == "__main__":
    key = jax.random.PRNGKey(0)
    k_param, k_ids = jax.random.split(key)

    params = init_params(k_param)
    packed = pack_params(params)

    input_ids = jax.random.randint(k_ids, (B, S), 0, V, dtype=jnp.int32)
    attention_mask = jnp.ones((B, S), dtype=jnp.int32).at[:, S - 2:].set(0)

    logits = amazon_classifier_forward(input_ids, attention_mask, packed)
    jax.block_until_ready(logits)

    assert logits.shape == (B, C) and logits.dtype == jnp.float32

    ref = reference_forward(input_ids, attention_mask, params)
    # slightly relaxed atol vs the pure-f32 version: MXU operands are bf16 (f32 accumulation)
    assert jnp.allclose(logits, ref, rtol=2e-2, atol=5e-3), (logits, ref)

    print("KERNEL_OK")
</pallas_src>

<mosaic_0001>
module attributes {stable_mosaic.version = 11 : i64} {
  func.func @_classifier_kernel(%arg0: i32, %arg1: memref<16x128xf32, #tpu.memory_space<vmem>>, %arg2: memref<16x128xf32, #tpu.memory_space<vmem>>, %arg3: memref<128x1280xbf16, #tpu.memory_space<vmem>>, %arg4: memref<256x128xbf16, #tpu.memory_space<vmem>>, %arg5: memref<16x128xf32, #tpu.memory_space<vmem>>, %arg6: memref<16x128xf32, #tpu.memory_space<vmem>>) attributes {dimension_semantics = [#tpu.dimension_semantics<arbitrary>], iteration_bounds = array<i64: 1>, scalar_prefetch = 0 : i64, scratch_operands = 0 : i64, tpu.core_type = #tpu.core_type<tc>, window_params = [{pipeline_mode = #tpu.pipeline_mode<synchronous>, transform_indices = @transform_0, window_bounds = array<i64: 16, 128>}, {pipeline_mode = #tpu.pipeline_mode<synchronous>, transform_indices = @transform_1, window_bounds = array<i64: 16, 128>}, {pipeline_mode = #tpu.pipeline_mode<synchronous>, transform_indices = @transform_2, window_bounds = array<i64: 128, 1280>}, {pipeline_mode = #tpu.pipeline_mode<synchronous>, transform_indices = @transform_3, window_bounds = array<i64: 256, 128>}, {pipeline_mode = #tpu.pipeline_mode<synchronous>, transform_indices = @transform_4, window_bounds = array<i64: 16, 128>}, {pipeline_mode = #tpu.pipeline_mode<synchronous>, transform_indices = @transform_5, window_bounds = array<i64: 16, 128>}]} {
    %c0 = arith.constant 0 : index
    %c0_0 = arith.constant 0 : index
    %0 = vector.load %arg1[%c0, %c0_0] : memref<16x128xf32, #tpu.memory_space<vmem>>, vector<16x128xf32>
    %c0_1 = arith.constant 0 : index
    %c0_2 = arith.constant 0 : index
    %1 = vector.load %arg5[%c0_1, %c0_2] : memref<16x128xf32, #tpu.memory_space<vmem>>, vector<16x128xf32>
    %c0_3 = arith.constant 0 : index
    %c0_4 = arith.constant 0 : index
    %2 = vector.load %arg2[%c0_3, %c0_4] : memref<16x128xf32, #tpu.memory_space<vmem>>, vector<16x16xf32>
    %3 = vector.extract_strided_slice %1 {offsets = [6, 0], sizes = [1, 128], strides = [1, 1]} : vector<16x128xf32> to vector<1x128xf32>
    %4 = vector.extract_strided_slice %1 {offsets = [7, 0], sizes = [1, 128], strides = [1, 1]} : vector<16x128xf32> to vector<1x128xf32>
    %5 = vector.extract_strided_slice %1 {offsets = [8, 0], sizes = [1, 128], strides = [1, 1]} : vector<16x128xf32> to vector<1x128xf32>
    %6 = vector.extract_strided_slice %1 {offsets = [9, 0], sizes = [1, 128], strides = [1, 1]} : vector<16x128xf32> to vector<1x128xf32>
    %7 = vector.extract_strided_slice %1 {offsets = [10, 0], sizes = [1, 128], strides = [1, 1]} : vector<16x128xf32> to vector<1x128xf32>
    %8 = vector.extract_strided_slice %1 {offsets = [11, 0], sizes = [1, 128], strides = [1, 1]} : vector<16x128xf32> to vector<1x128xf32>
    %9 = vector.extract_strided_slice %1 {offsets = [12, 0], sizes = [1, 128], strides = [1, 1]} : vector<16x128xf32> to vector<1x128xf32>
    %10 = vector.extract_strided_slice %1 {offsets = [13, 0], sizes = [1, 128], strides = [1, 1]} : vector<16x128xf32> to vector<1x128xf32>
    %11 = vector.extract_strided_slice %1 {offsets = [14, 0], sizes = [1, 128], strides = [1, 1]} : vector<16x128xf32> to vector<1x128xf32>
    %12 = tpu.iota {dimensions = array<i32: 1>} : vector<1x128xi32>
    %c32_i32 = arith.constant 32 : i32
    %13 = vector.broadcast %c32_i32 : i32 to vector<1x128xi32>
    %14 = arith.cmpi slt, %12, %13 : vector<1x128xi32>
    %15 = arith.extui %14 : vector<1x128xi1> to vector<1x128xi32>
    %16 = arith.sitofp %15 : vector<1x128xi32> to vector<1x128xf32>
    %c0_5 = arith.constant 0 : index
    %c0_6 = arith.constant 0 : index
    %17 = vector.load %arg3[%c0_5, %c0_6] : memref<128x1280xbf16, #tpu.memory_space<vmem>>, vector<128x768xbf16>
    %18 = arith.truncf %0 : vector<16x128xf32> to vector<16x128xbf16>
    %cst = arith.constant dense<0.000000e+00> : vector<16x768xf32>
    %19 = tpu.matmul %18, %17, %cst {dimension_numbers = #tpu.dot_dimension_numbers<[1], [0], [0], [1], [0, 0, 1, 1], [], []>} : vector<16x128xbf16>, vector<128x768xbf16>, vector<16x768xf32> -> vector<16x768xf32>
    %20 = vector.extract_strided_slice %19 {offsets = [0, 0], sizes = [16, 128], strides = [1, 1]} : vector<16x768xf32> to vector<16x128xf32>
    %21 = vector.extract_strided_slice %1 {offsets = [0, 0], sizes = [1, 128], strides = [1, 1]} : vector<16x128xf32> to vector<1x128xf32>
    %22 = vector.broadcast %21 : vector<1x128xf32> to vector<16x128xf32>
    %23 = arith.addf %20, %22 : vector<16x128xf32>
    %24 = vector.extract_strided_slice %19 {offsets = [0, 256], sizes = [16, 128], strides = [1, 1]} : vector<16x768xf32> to vector<16x128xf32>
    %25 = vector.extract_strided_slice %1 {offsets = [2, 0], sizes = [1, 128], strides = [1, 1]} : vector<16x128xf32> to vector<1x128xf32>
    %26 = vector.broadcast %25 : vector<1x128xf32> to vector<16x128xf32>
    %27 = arith.addf %24, %26 : vector<16x128xf32>
    %28 = vector.extract_strided_slice %19 {offsets = [0, 512], sizes = [16, 128], strides = [1, 1]} : vector<16x768xf32> to vector<16x128xf32>
    %29 = vector.extract_strided_slice %1 {offsets = [4, 0], sizes = [1, 128], strides = [1, 1]} : vector<16x128xf32> to vector<1x128xf32>
    %30 = vector.broadcast %29 : vector<1x128xf32> to vector<16x128xf32>
    %31 = arith.addf %28, %30 : vector<16x128xf32>
    %32 = arith.truncf %23 : vector<16x128xf32> to vector<16x128xbf16>
    %33 = arith.truncf %27 : vector<16x128xf32> to vector<16x128xbf16>
    %cst_7 = arith.constant dense<0.000000e+00> : vector<16x16xf32>
    %34 = tpu.matmul %32, %33, %cst_7 {dimension_numbers = #tpu.dot_dimension_numbers<[1], [1], [0], [0], [0, 0, 1, 0], [], []>} : vector<16x128xbf16>, vector<16x128xbf16>, vector<16x16xf32> -> vector<16x16xf32>
    %35 = arith.addf %34, %2 : vector<16x16xf32>
    %cst_8 = arith.constant dense<0xFF800000> : vector<16xf32>
    %36 = vector.multi_reduction <maximumf>, %35, %cst_8 [1] : vector<16x16xf32> to vector<16xf32>
    %37 = vector.shape_cast %36 : vector<16xf32> to vector<16x1xf32>
    %38 = vector.broadcast %37 : vector<16x1xf32> to vector<16x16xf32>
    %39 = arith.subf %35, %38 : vector<16x16xf32>
    %40 = math.exp %39 : vector<16x16xf32>
    %cst_9 = arith.constant dense<0.000000e+00> : vector<16xf32>
    %41 = vector.multi_reduction <add>, %40, %cst_9 [1] : vector<16x16xf32> to vector<16xf32>
    %42 = vector.shape_cast %41 : vector<16xf32> to vector<16x1xf32>
    %43 = tpu.reciprocal %42 {approx = true} : vector<16x1xf32> -> vector<16x1xf32>
    %44 = vector.broadcast %43 : vector<16x1xf32> to vector<16x16xf32>
    %45 = arith.mulf %40, %44 : vector<16x16xf32>
    %46 = arith.truncf %45 : vector<16x16xf32> to vector<16x16xbf16>
    %47 = arith.truncf %31 : vector<16x128xf32> to vector<16x128xbf16>
    %cst_10 = arith.constant dense<0.000000e+00> : vector<16x128xf32>
    %48 = tpu.matmul %46, %47, %cst_10 {dimension_numbers = #tpu.dot_dimension_numbers<[1], [0], [0], [1], [0, 0, 1, 1], [], []>} : vector<16x16xbf16>, vector<16x128xbf16>, vector<16x128xf32> -> vector<16x128xf32>
    %49 = arith.truncf %48 : vector<16x128xf32> to vector<16x128xbf16>
    %50 = vector.extract_strided_slice %19 {offsets = [0, 128], sizes = [16, 128], strides = [1, 1]} : vector<16x768xf32> to vector<16x128xf32>
    %51 = vector.extract_strided_slice %1 {offsets = [1, 0], sizes = [1, 128], strides = [1, 1]} : vector<16x128xf32> to vector<1x128xf32>
    %52 = vector.broadcast %51 : vector<1x128xf32> to vector<16x128xf32>
    %53 = arith.addf %50, %52 : vector<16x128xf32>
    %54 = vector.extract_strided_slice %19 {offsets = [0, 384], sizes = [16, 128], strides = [1, 1]} : vector<16x768xf32> to vector<16x128xf32>
    %55 = vector.extract_strided_slice %1 {offsets = [3, 0], sizes = [1, 128], strides = [1, 1]} : vector<16x128xf32> to vector<1x128xf32>
    %56 = vector.broadcast %55 : vector<1x128xf32> to vector<16x128xf32>
    %57 = arith.addf %54, %56 : vector<16x128xf32>
    %58 = vector.extract_strided_slice %19 {offsets = [0, 640], sizes = [16, 128], strides = [1, 1]} : vector<16x768xf32> to vector<16x128xf32>
    %59 = vector.extract_strided_slice %1 {offsets = [5, 0], sizes = [1, 128], strides = [1, 1]} : vector<16x128xf32> to vector<1x128xf32>
    %60 = vector.broadcast %59 : vector<1x128xf32> to vector<16x128xf32>
    %61 = arith.addf %58, %60 : vector<16x128xf32>
    %62 = arith.truncf %53 : vector<16x128xf32> to vector<16x128xbf16>
    %63 = arith.truncf %57 : vector<16x128xf32> to vector<16x128xbf16>
    %cst_11 = arith.constant dense<0.000000e+00> : vector<16x16xf32>
    %64 = tpu.matmul %62, %63, %cst_11 {dimension_numbers = #tpu.dot_dimension_numbers<[1], [1], [0], [0], [0, 0, 1, 0], [], []>} : vector<16x128xbf16>, vector<16x128xbf16>, vector<16x16xf32> -> vector<16x16xf32>
    %65 = arith.addf %64, %2 : vector<16x16xf32>
    %cst_12 = arith.constant dense<0xFF800000> : vector<16xf32>
    %66 = vector.multi_reduction <maximumf>, %65, %cst_12 [1] : vector<16x16xf32> to vector<16xf32>
    %67 = vector.shape_cast %66 : vector<16xf32> to vector<16x1xf32>
    %68 = vector.broadcast %67 : vector<16x1xf32> to vector<16x16xf32>
    %69 = arith.subf %65, %68 : vector<16x16xf32>
    %70 = math.exp %69 : vector<16x16xf32>
    %cst_13 = arith.constant dense<0.000000e+00> : vector<16xf32>
    %71 = vector.multi_reduction <add>, %70, %cst_13 [1] : vector<16x16xf32> to vector<16xf32>
    %72 = vector.shape_cast %71 : vector<16xf32> to vector<16x1xf32>
    %73 = tpu.reciprocal %72 {approx = true} : vector<16x1xf32> -> vector<16x1xf32>
    %74 = vector.broadcast %73 : vector<16x1xf32> to vector<16x16xf32>
    %75 = arith.mulf %70, %74 : vector<16x16xf32>
    %76 = arith.truncf %75 : vector<16x16xf32> to vector<16x16xbf16>
    %77 = arith.truncf %61 : vector<16x128xf32> to vector<16x128xbf16>
    %cst_14 = arith.constant dense<0.000000e+00> : vector<16x128xf32>
    %78 = tpu.matmul %76, %77, %cst_14 {dimension_numbers = #tpu.dot_dimension_numbers<[1], [0], [0], [1], [0, 0, 1, 1], [], []>} : vector<16x16xbf16>, vector<16x128xbf16>, vector<16x128xf32> -> vector<16x128xf32>
    %79 = arith.truncf %78 : vector<16x128xf32> to vector<16x128xbf16>
    %80 = tpu.concatenate %49, %79 in 1 : vector<16x128xbf16>, vector<16x128xbf16> -> vector<16x256xbf16>
    %c0_15 = arith.constant 0 : index
    %c0_16 = arith.constant 0 : index
    %81 = vector.load %arg4[%c0_15, %c0_16] : memref<256x128xbf16, #tpu.memory_space<vmem>>, vector<256x128xbf16>
    %cst_17 = arith.constant dense<0.000000e+00> : vector<16x128xf32>
    %82 = tpu.matmul %80, %81, %cst_17 {dimension_numbers = #tpu.dot_dimension_numbers<[1], [0], [0], [1], [0, 0, 1, 1], [], []>} : vector<16x256xbf16>, vector<256x128xbf16>, vector<16x128xf32> -> vector<16x128xf32>
    %83 = vector.broadcast %3 : vector<1x128xf32> to vector<16x128xf32>
    %84 = arith.addf %82, %83 : vector<16x128xf32>
    %85 = arith.addf %0, %84 : vector<16x128xf32>
    %cst_18 = arith.constant dense<0.000000e+00> : vector<16xf32>
    %86 = vector.multi_reduction <add>, %85, %cst_18 [1] : vector<16x128xf32> to vector<16xf32>
    %87 = vector.shape_cast %86 : vector<16xf32> to vector<16x1xf32>
    %cst_19 = arith.constant 3.125000e-02 : f32
    %88 = vector.broadcast %cst_19 : f32 to vector<16x1xf32>
    %89 = arith.mulf %87, %88 : vector<16x1xf32>
    %90 = vector.broadcast %89 : vector<16x1xf32> to vector<16x128xf32>
    %91 = arith.subf %85, %90 : vector<16x128xf32>
    %92 = vector.broadcast %16 : vector<1x128xf32> to vector<16x128xf32>
    %93 = arith.mulf %91, %92 : vector<16x128xf32>
    %94 = arith.mulf %93, %93 : vector<16x128xf32>
    %cst_20 = arith.constant dense<0.000000e+00> : vector<16xf32>
    %95 = vector.multi_reduction <add>, %94, %cst_20 [1] : vector<16x128xf32> to vector<16xf32>
    %96 = vector.shape_cast %95 : vector<16xf32> to vector<16x1xf32>
    %cst_21 = arith.constant 3.125000e-02 : f32
    %97 = vector.broadcast %cst_21 : f32 to vector<16x1xf32>
    %98 = arith.mulf %96, %97 : vector<16x1xf32>
    %99 = vector.broadcast %89 : vector<16x1xf32> to vector<16x128xf32>
    %100 = arith.subf %85, %99 : vector<16x128xf32>
    %cst_22 = arith.constant 9.99999996E-13 : f32
    %101 = vector.broadcast %cst_22 : f32 to vector<16x1xf32>
    %102 = arith.addf %98, %101 : vector<16x1xf32>
    %103 = math.rsqrt %102 : vector<16x1xf32>
    %104 = vector.broadcast %103 : vector<16x1xf32> to vector<16x128xf32>
    %105 = arith.mulf %100, %104 : vector<16x128xf32>
    %106 = vector.broadcast %4 : vector<1x128xf32> to vector<16x128xf32>
    %107 = arith.mulf %105, %106 : vector<16x128xf32>
    %108 = vector.broadcast %5 : vector<1x128xf32> to vector<16x128xf32>
    %109 = arith.addf %107, %108 : vector<16x128xf32>
    %c0_23 = arith.constant 0 : index
    %c768 = arith.constant 768 : index
    %110 = vector.load %arg3[%c0_23, %c768] : memref<128x1280xbf16, #tpu.memory_space<vmem>>, vector<128x128xbf16>
    %c0_24 = arith.constant 0 : index
    %c896 = arith.constant 896 : index
    %111 = vector.load %arg3[%c0_24, %c896] : memref<128x1280xbf16, #tpu.memory_space<vmem>>, vector<128x128xbf16>
    %112 = arith.truncf %109 : vector<16x128xf32> to vector<16x128xbf16>
    %cst_25 = arith.constant dense<0.000000e+00> : vector<16x128xf32>
    %113 = tpu.matmul %112, %110, %cst_25 {dimension_numbers = #tpu.dot_dimension_numbers<[1], [0], [0], [1], [0, 0, 1, 1], [], []>} : vector<16x128xbf16>, vector<128x128xbf16>, vector<16x128xf32> -> vector<16x128xf32>
    %114 = vector.broadcast %6 : vector<1x128xf32> to vector<16x128xf32>
    %115 = arith.addf %113, %114 : vector<16x128xf32>
    %116 = arith.mulf %115, %115 : vector<16x128xf32>
    %117 = arith.mulf %115, %116 : vector<16x128xf32>
    %cst_26 = arith.constant 4.471500e-02 : f32
    %118 = vector.broadcast %cst_26 : f32 to vector<16x128xf32>
    %119 = arith.mulf %118, %117 : vector<16x128xf32>
    %120 = arith.addf %115, %119 : vector<16x128xf32>
    %cst_27 = arith.constant 0.797884583 : f32
    %121 = vector.broadcast %cst_27 : f32 to vector<16x128xf32>
    %122 = arith.mulf %121, %120 : vector<16x128xf32>
    %123 = math.tanh %122 : vector<16x128xf32>
    %cst_28 = arith.constant 1.000000e+00 : f32
    %124 = vector.broadcast %cst_28 : f32 to vector<16x128xf32>
    %125 = arith.addf %124, %123 : vector<16x128xf32>
    %cst_29 = arith.constant 5.000000e-01 : f32
    %126 = vector.broadcast %cst_29 : f32 to vector<16x128xf32>
    %127 = arith.mulf %126, %125 : vector<16x128xf32>
    %128 = arith.mulf %115, %127 : vector<16x128xf32>
    %129 = arith.truncf %128 : vector<16x128xf32> to vector<16x128xbf16>
    %cst_30 = arith.constant dense<0.000000e+00> : vector<16x128xf32>
    %130 = tpu.matmul %129, %111, %cst_30 {dimension_numbers = #tpu.dot_dimension_numbers<[1], [0], [0], [1], [0, 0, 1, 1], [], []>} : vector<16x128xbf16>, vector<128x128xbf16>, vector<16x128xf32> -> vector<16x128xf32>
    %131 = vector.broadcast %7 : vector<1x128xf32> to vector<16x128xf32>
    %132 = arith.addf %130, %131 : vector<16x128xf32>
    %133 = arith.addf %109, %132 : vector<16x128xf32>
    %cst_31 = arith.constant dense<0.000000e+00> : vector<16xf32>
    %134 = vector.multi_reduction <add>, %133, %cst_31 [1] : vector<16x128xf32> to vector<16xf32>
    %135 = vector.shape_cast %134 : vector<16xf32> to vector<16x1xf32>
    %cst_32 = arith.constant 3.125000e-02 : f32
    %136 = vector.broadcast %cst_32 : f32 to vector<16x1xf32>
    %137 = arith.mulf %135, %136 : vector<16x1xf32>
    %138 = vector.broadcast %137 : vector<16x1xf32> to vector<16x128xf32>
    %139 = arith.subf %133, %138 : vector<16x128xf32>
    %140 = vector.broadcast %16 : vector<1x128xf32> to vector<16x128xf32>
    %141 = arith.mulf %139, %140 : vector<16x128xf32>
    %142 = arith.mulf %141, %141 : vector<16x128xf32>
    %cst_33 = arith.constant dense<0.000000e+00> : vector<16xf32>
    %143 = vector.multi_reduction <add>, %142, %cst_33 [1] : vector<16x128xf32> to vector<16xf32>
    %144 = vector.shape_cast %143 : vector<16xf32> to vector<16x1xf32>
    %cst_34 = arith.constant 3.125000e-02 : f32
    %145 = vector.broadcast %cst_34 : f32 to vector<16x1xf32>
    %146 = arith.mulf %144, %145 : vector<16x1xf32>
    %147 = vector.broadcast %137 : vector<16x1xf32> to vector<16x128xf32>
    %148 = arith.subf %133, %147 : vector<16x128xf32>
    %cst_35 = arith.constant 9.99999996E-13 : f32
    %149 = vector.broadcast %cst_35 : f32 to vector<16x1xf32>
    %150 = arith.addf %146, %149 : vector<16x1xf32>
    %151 = math.rsqrt %150 : vector<16x1xf32>
    %152 = vector.broadcast %151 : vector<16x1xf32> to vector<16x128xf32>
    %153 = arith.mulf %148, %152 : vector<16x128xf32>
    %154 = vector.broadcast %8 : vector<1x128xf32> to vector<16x128xf32>
    %155 = arith.mulf %153, %154 : vector<16x128xf32>
    %156 = vector.broadcast %9 : vector<1x128xf32> to vector<16x128xf32>
    %157 = arith.addf %155, %156 : vector<16x128xf32>
    %c0_36 = arith.constant 0 : index
    %c1024 = arith.constant 1024 : index
    %158 = vector.load %arg3[%c0_36, %c1024] : memref<128x1280xbf16, #tpu.memory_space<vmem>>, vector<128x128xbf16>
    %c0_37 = arith.constant 0 : index
    %c1152 = arith.constant 1152 : index
    %159 = vector.load %arg3[%c0_37, %c1152] : memref<128x1280xbf16, #tpu.memory_space<vmem>>, vector<128x128xbf16>
    %160 = arith.truncf %157 : vector<16x128xf32> to vector<16x128xbf16>
    %cst_38 = arith.constant dense<0.000000e+00> : vector<16x128xf32>
    %161 = tpu.matmul %160, %158, %cst_38 {dimension_numbers = #tpu.dot_dimension_numbers<[1], [0], [0], [1], [0, 0, 1, 1], [], []>} : vector<16x128xbf16>, vector<128x128xbf16>, vector<16x128xf32> -> vector<16x128xf32>
    %162 = vector.broadcast %10 : vector<1x128xf32> to vector<16x128xf32>
    %163 = arith.addf %161, %162 : vector<16x128xf32>
    %164 = math.tanh %163 : vector<16x128xf32>
    %165 = arith.truncf %164 : vector<16x128xf32> to vector<16x128xbf16>
    %cst_39 = arith.constant dense<0.000000e+00> : vector<16x128xf32>
    %166 = tpu.matmul %165, %159, %cst_39 {dimension_numbers = #tpu.dot_dimension_numbers<[1], [0], [0], [1], [0, 0, 1, 1], [], []>} : vector<16x128xbf16>, vector<128x128xbf16>, vector<16x128xf32> -> vector<16x128xf32>
    %167 = vector.broadcast %11 : vector<1x128xf32> to vector<16x128xf32>
    %168 = arith.addf %166, %167 : vector<16x128xf32>
    %c0_40 = arith.constant 0 : index
    %c0_41 = arith.constant 0 : index
    %169 = vector.load %arg6[%c0_40, %c0_41] : memref<16x128xf32, #tpu.memory_space<vmem>>, vector<16x128xf32>
    tpu.vector_store %arg6[%c0_40, %c0_41], %168 {strides = array<i32>} : memref<16x128xf32, #tpu.memory_space<vmem>>, vector<16x128xf32>,
    return
  }
  func.func @transform_0(%arg0: i32) -> (i32, i32) {
    %c0_i32 = arith.constant 0 : i32
    %c0_i32_0 = arith.constant 0 : i32
    %c0_i32_1 = arith.constant 0 : i32
    return %c0_i32, %c0_i32_0 : i32, i32
  }
  func.func @transform_1(%arg0: i32) -> (i32, i32) {
    %c0_i32 = arith.constant 0 : i32
    %c0_i32_0 = arith.constant 0 : i32
    %c0_i32_1 = arith.constant 0 : i32
    return %c0_i32, %c0_i32_0 : i32, i32
  }
  func.func @transform_2(%arg0: i32) -> (i32, i32) {
    %c0_i32 = arith.constant 0 : i32
    %c0_i32_0 = arith.constant 0 : i32
    %c0_i32_1 = arith.constant 0 : i32
    return %c0_i32, %c0_i32_0 : i32, i32
  }
  func.func @transform_3(%arg0: i32) -> (i32, i32) {
    %c0_i32 = arith.constant 0 : i32
    %c0_i32_0 = arith.constant 0 : i32
    %c0_i32_1 = arith.constant 0 : i32
    return %c0_i32, %c0_i32_0 : i32, i32
  }
  func.func @transform_4(%arg0: i32) -> (i32, i32) {
    %c0_i32 = arith.constant 0 : i32
    %c0_i32_0 = arith.constant 0 : i32
    %c0_i32_1 = arith.constant 0 : i32
    return %c0_i32, %c0_i32_0 : i32, i32
  }
  func.func @transform_5(%arg0: i32) -> (i32, i32) {
    %c0_i32 = arith.constant 0 : i32
    %c0_i32_0 = arith.constant 0 : i32
    %c0_i32_1 = arith.constant 0 : i32
    return %c0_i32, %c0_i32_0 : i32, i32
  }
}

</mosaic_0001>

<llo_original>
// kernel: tpu_custom_call.1
$region0: #{tpu_custom_call.1}
  #allocation0 [shape = 'u32[]', space=smem, size = 0x4, offset = 0x4, fixed_abs, tag = 'smem constant byte address 0x4 - core index']
  #allocation1 [shape = 'u32[144,128]{1,0:T(1,128)}', space=vmem, size = 0x12000, scoped, tag = 'internal scratch']
  %s0 = inlined_call_operand.hbm [shape: f32[16,128], index: 0, kind: input, shape index: {}]
  %s1 = inlined_call_operand.hbm [shape: f32[16,128], index: 1, kind: input, shape index: {}]
  %s2 = inlined_call_operand.hbm [shape: bf16[128,1280], index: 2, kind: input, shape index: {}]
  %s3 = inlined_call_operand.hbm [shape: bf16[256,128], index: 3, kind: input, shape index: {}]
  %s4 = inlined_call_operand.hbm [shape: f32[16,128], index: 4, kind: input, shape index: {}]
  %s5 = inlined_call_operand.hbm [shape: f32[16,128], index: 5, kind: output, shape index: {}]
  %s6 = sld [smem:[#allocation0]]
  $region50: #{tpu_custom_call.1} parent=0
    _
  %s8 = ssub.s32 1, %s6
  %s9 = scalar_select 0, %s8, %s6
  $region1: #{tpu_custom_call.1} parent=0
    #allocation2 [shape = 'u8[8192]{0}', space=vmem, size = 0x2000, scoped, tag = 'input window, operand 0, single buffered']
    #allocation3 [shape = 's32[1]{0}', space=sflag, size = 0x4, scoped, tag = 'scoped memory for tpu_custom_call.1']
    #allocation4 [shape = 's32[1]{0}', space=sflag, size = 0x4, scoped, tag = 'scoped memory for tpu_custom_call.1']
    #allocation5 [shape = 'u8[8192]{0}', space=vmem, size = 0x2000, scoped, tag = 'input window, operand 1, single buffered']
    #allocation6 [shape = 's32[1]{0}', space=sflag, size = 0x4, scoped, tag = 'scoped memory for tpu_custom_call.1']
    #allocation7 [shape = 'u8[327680]{0}', space=vmem, size = 0x50000, scoped, tag = 'input window, operand 2, single buffered']
    #allocation8 [shape = 'u8[65536]{0}', space=vmem, size = 0x10000, scoped, tag = 'input window, operand 3, single buffered']
    #allocation9 [shape = 's32[1]{0}', space=sflag, size = 0x4, scoped, tag = 'scoped memory for tpu_custom_call.1']
    #allocation10 [shape = 'u8[8192]{0}', space=vmem, size = 0x2000, scoped, tag = 'input window, operand 4, single buffered']
    #allocation11 [shape = 'u8[8192]{0}', space=vmem, size = 0x2000, scoped, tag = 'output window, operand 0, single buffered']
    %10 = vsyncpa [#allocation3], 0
    %11 = vsyncpa [#allocation6], 0
    %12 = vsyncpa [#allocation9], 0
    %13 = vsyncpa [#allocation4], 0
    // Predicated region
    $region2: #{tpu_custom_call.1} parent=1 // pred_check
      _
    $region3: #{tpu_custom_call.1} parent=1 // pred_check_branch
      %15 = sbr.rel (0) target = $region5
    $region4: #{tpu_custom_call.1} parent=1 // pred_region
      %s17 = ssub.s32 256, 256
      %18 = vsyncadd [#allocation3], %s17
      %s19 = sshll.u32 [#allocation2], 4
      %s20 = int_to_ptr.vmem [resolvable:$true] %s19
      %25 = dma.hbm_to_vmem [thread:$0]  %s0, 256, %s20, [#allocation3], 128, 128, 8
    $region5: #{tpu_custom_call.1} parent=1 // pred_fallthru
      _
    // Predicated region
    $region6: #{tpu_custom_call.1} parent=1 // pred_check
      _
    $region7: #{tpu_custom_call.1} parent=1 // pred_check_branch
      %27 = sbr.rel (0) target = $region9
    $region8: #{tpu_custom_call.1} parent=1 // pred_region
      %s29 = ssub.s32 256, 256
      %30 = vsyncadd [#allocation6], %s29
      %s31 = sshll.u32 [#allocation5], 4
      %s32 = int_to_ptr.vmem [resolvable:$true] %s31
      %37 = dma.hbm_to_vmem [thread:$0]  %s1, 256, %s32, [#allocation6], 128, 128, 8
    $region9: #{tpu_custom_call.1} parent=1 // pred_fallthru
      _
    // Predicated region
    $region10: #{tpu_custom_call.1} parent=1 // pred_check
      _
    $region11: #{tpu_custom_call.1} parent=1 // pred_check_branch
      %39 = sbr.rel (0) target = $region13
    $region12: #{tpu_custom_call.1} parent=1 // pred_region
      %s41 = ssub.s32 10240, 10240
      %42 = vsyncadd [#allocation6], %s41
      %s43 = sshll.u32 [#allocation7], 4
      %s44 = int_to_ptr.vmem [resolvable:$true] %s43
      %49 = dma.hbm_to_vmem [thread:$0]  %s2, 10240, %s44, [#allocation6], 640, 640, 40
    $region13: #{tpu_custom_call.1} parent=1 // pred_fallthru
      _
    // Predicated region
    $region14: #{tpu_custom_call.1} parent=1 // pred_check
      _
    $region15: #{tpu_custom_call.1} parent=1 // pred_check_branch
      %51 = sbr.rel (0) target = $region17
    $region16: #{tpu_custom_call.1} parent=1 // pred_region
      %s53 = ssub.s32 2048, 2048
      %54 = vsyncadd [#allocation9], %s53
      %s55 = sshll.u32 [#allocation8], 4
      %s56 = int_to_ptr.vmem [resolvable:$true] %s55
      %61 = dma.hbm_to_vmem [thread:$0]  %s3, 2048, %s56, [#allocation9], 64, 64, 4
    $region17: #{tpu_custom_call.1} parent=1 // pred_fallthru
      _
    // Predicated region
    $region18: #{tpu_custom_call.1} parent=1 // pred_check
      _
    $region19: #{tpu_custom_call.1} parent=1 // pred_check_branch
      %63 = sbr.rel (0) target = $region21
    $region20: #{tpu_custom_call.1} parent=1 // pred_region
      %s65 = ssub.s32 256, 256
      %66 = vsyncadd [#allocation9], %s65
      %s67 = sshll.u32 [#allocation10], 4
      %s68 = int_to_ptr.vmem [resolvable:$true] %s67
      %73 = dma.hbm_to_vmem [thread:$0]  %s4, 256, %s68, [#allocation9], 128, 128, 8
    $region21: #{tpu_custom_call.1} parent=1 // pred_fallthru
      _
    // Predicated region
    $region22: #{tpu_custom_call.1} parent=1 // pred_check
      _
    $region23: #{tpu_custom_call.1} parent=1 // pred_check_branch
      %75 = sbr.rel (0) target = $region25
    $region24: #{tpu_custom_call.1} parent=1 // pred_region
      %76 = dma.done [#allocation3], 256
    $region25: #{tpu_custom_call.1} parent=1 // pred_fallthru
      _
    // Predicated region
    $region26: #{tpu_custom_call.1} parent=1 // pred_check
      _
    $region27: #{tpu_custom_call.1} parent=1 // pred_check_branch
      %78 = sbr.rel (0) target = $region29
    $region28: #{tpu_custom_call.1} parent=1 // pred_region
      %79 = dma.done [#allocation6], 256
    $region29: #{tpu_custom_call.1} parent=1 // pred_fallthru
      _
    // Predicated region
    $region30: #{tpu_custom_call.1} parent=1 // pred_check
      _
    $region31: #{tpu_custom_call.1} parent=1 // pred_check_branch
      %81 = sbr.rel (0) target = $region33
    $region32: #{tpu_custom_call.1} parent=1 // pred_region
      %82 = dma.done [#allocation6], 10240
    $region33: #{tpu_custom_call.1} parent=1 // pred_fallthru
      _
    // Predicated region
    $region34: #{tpu_custom_call.1} parent=1 // pred_check
      _
    $region35: #{tpu_custom_call.1} parent=1 // pred_check_branch
      %84 = sbr.rel (0) target = $region37
    $region36: #{tpu_custom_call.1} parent=1 // pred_region
      %85 = dma.done [#allocation9], 2048
    $region37: #{tpu_custom_call.1} parent=1 // pred_fallthru
      _
    // Predicated region
    $region38: #{tpu_custom_call.1} parent=1 // pred_check
      _
    $region39: #{tpu_custom_call.1} parent=1 // pred_check_branch
      %87 = sbr.rel (0) target = $region41
    $region40: #{tpu_custom_call.1} parent=1 // pred_region
      %88 = dma.done [#allocation9], 256
    $region41: #{tpu_custom_call.1} parent=1 // pred_fallthru
      _
    %v90 = vld [vmem:[#allocation2] sm:$0xff]
    %v91 = vld [vmem:[#allocation2 + $0x8] sm:$0xff]
    %v92 = vld [vmem:[#allocation10] sm:$0xff]
    %v93 = vld [vmem:[#allocation10 + $0x8] sm:$0xff]
    %v94 = vld [vmem:[#allocation5] sm:$0xff]
    %v95 = vld [vmem:[#allocation5 + $0x8] sm:$0xff]
    %v96 = vlaneseq
    %v97 = vand.u32 %v96, 127
    %vm98 = vcmp.lt.s32.totalorder %v97, 32
    %v99 = vsel %vm98, 1, 0
    %v100 = vcvt.s32.f32 %v99
    %v101 = vld [vmem:[#allocation7] sm:$0xff]
    %v102 = vld [vmem:[#allocation7 + $0x8] sm:$0xff]
    %v103 = vld [vmem:[#allocation7 + $0x10] sm:$0xff]
    %v104 = vld [vmem:[#allocation7 + $0x28] sm:$0xff]
    %v105 = vld [vmem:[#allocation7 + $0x30] sm:$0xff]
    %v106 = vld [vmem:[#allocation7 + $0x38] sm:$0xff]
    %v107 = vld [vmem:[#allocation7 + $0x50] sm:$0xff]
    %v108 = vld [vmem:[#allocation7 + $0x58] sm:$0xff]
    %v109 = vld [vmem:[#allocation7 + $0x60] sm:$0xff]
    %v110 = vld [vmem:[#allocation7 + $0x78] sm:$0xff]
    %v111 = vld [vmem:[#allocation7 + $0x80] sm:$0xff]
    %v112 = vld [vmem:[#allocation7 + $0x88] sm:$0xff]
    %v113 = vld [vmem:[#allocation7 + $0xa0] sm:$0xff]
    %v114 = vld [vmem:[#allocation7 + $0xa8] sm:$0xff]
    %v115 = vld [vmem:[#allocation7 + $0xb0] sm:$0xff]
    %v116 = vld [vmem:[#allocation7 + $0xc8] sm:$0xff]
    %v117 = vld [vmem:[#allocation7 + $0xd0] sm:$0xff]
    %v118 = vld [vmem:[#allocation7 + $0xd8] sm:$0xff]
    %v119 = vld [vmem:[#allocation7 + $0xf0] sm:$0xff]
    %v120 = vld [vmem:[#allocation7 + $0xf8] sm:$0xff]
    %v121 = vld [vmem:[#allocation7 + $0x100] sm:$0xff]
    %v122 = vld [vmem:[#allocation7 + $0x118] sm:$0xff]
    %v123 = vld [vmem:[#allocation7 + $0x120] sm:$0xff]
    %v124 = vld [vmem:[#allocation7 + $0x128] sm:$0xff]
    %v125 = vld [vmem:[#allocation7 + $0x140] sm:$0xff]
    %v126 = vld [vmem:[#allocation7 + $0x148] sm:$0xff]
    %v127 = vld [vmem:[#allocation7 + $0x150] sm:$0xff]
    %v128 = vld [vmem:[#allocation7 + $0x168] sm:$0xff]
    %v129 = vld [vmem:[#allocation7 + $0x170] sm:$0xff]
    %v130 = vld [vmem:[#allocation7 + $0x178] sm:$0xff]
    %v131 = vld [vmem:[#allocation7 + $0x190] sm:$0xff]
    %v132 = vld [vmem:[#allocation7 + $0x198] sm:$0xff]
    %v133 = vld [vmem:[#allocation7 + $0x1a0] sm:$0xff]
    %v134 = vld [vmem:[#allocation7 + $0x1b8] sm:$0xff]
    %v135 = vld [vmem:[#allocation7 + $0x1c0] sm:$0xff]
    %v136 = vld [vmem:[#allocation7 + $0x1c8] sm:$0xff]
    %v137 = vld [vmem:[#allocation7 + $0x1e0] sm:$0xff]
    %v138 = vld [vmem:[#allocation7 + $0x1e8] sm:$0xff]
    %v139 = vld [vmem:[#allocation7 + $0x1f0] sm:$0xff]
    %v140 = vld [vmem:[#allocation7 + $0x208] sm:$0xff]
    %v141 = vld [vmem:[#allocation7 + $0x210] sm:$0xff]
    %v142 = vld [vmem:[#allocation7 + $0x218] sm:$0xff]
    %v143 = vld [vmem:[#allocation7 + $0x230] sm:$0xff]
    %v144 = vld [vmem:[#allocation7 + $0x238] sm:$0xff]
    %v145 = vld [vmem:[#allocation7 + $0x240] sm:$0xff]
    %v146 = vld [vmem:[#allocation7 + $0x258] sm:$0xff]
    %v147 = vld [vmem:[#allocation7 + $0x260] sm:$0xff]
    %v148 = vld [vmem:[#allocation7 + $0x268] sm:$0xff]
    %v149 = vpack.c.bf16 %v91, %v90
    %v198 = vunpack.c.l.b16 %v101
    %v199 = vunpack.c.h.b16 %v101
    %v200 = vunpack.c.l.b16 %v102
    %v201 = vunpack.c.h.b16 %v102
    %v202 = vunpack.c.l.b16 %v103
    %v203 = vunpack.c.h.b16 %v103
    %v204 = vunpack.c.l.b16 %v104
    %v205 = vunpack.c.h.b16 %v104
    %v206 = vunpack.c.l.b16 %v105
    %v207 = vunpack.c.h.b16 %v105
    %v208 = vunpack.c.l.b16 %v106
    %v209 = vunpack.c.h.b16 %v106
    %v210 = vunpack.c.l.b16 %v107
    %v211 = vunpack.c.h.b16 %v107
    %v212 = vunpack.c.l.b16 %v108
    %v213 = vunpack.c.h.b16 %v108
    %v214 = vunpack.c.l.b16 %v109
    %v215 = vunpack.c.h.b16 %v109
    %v216 = vunpack.c.l.b16 %v110
    %v217 = vunpack.c.h.b16 %v110
    %v218 = vunpack.c.l.b16 %v111
    %v219 = vunpack.c.h.b16 %v111
    %v220 = vunpack.c.l.b16 %v112
    %v221 = vunpack.c.h.b16 %v112
    %v222 = vunpack.c.l.b16 %v113
    %v223 = vunpack.c.h.b16 %v113
    %v224 = vunpack.c.l.b16 %v114
    %v225 = vunpack.c.h.b16 %v114
    %v226 = vunpack.c.l.b16 %v115
    %v227 = vunpack.c.h.b16 %v115
    %v228 = vunpack.c.l.b16 %v116
    %v229 = vunpack.c.h.b16 %v116
    %v230 = vunpack.c.l.b16 %v117
    %v231 = vunpack.c.h.b16 %v117
    %v232 = vunpack.c.l.b16 %v118
    %v233 = vunpack.c.h.b16 %v118
    %v234 = vunpack.c.l.b16 %v119
    %v235 = vunpack.c.h.b16 %v119
    %v236 = vunpack.c.l.b16 %v120
    %v237 = vunpack.c.h.b16 %v120
    %v238 = vunpack.c.l.b16 %v121
    %v239 = vunpack.c.h.b16 %v121
    %v240 = vunpack.c.l.b16 %v122
    %v241 = vunpack.c.h.b16 %v122
    %v242 = vunpack.c.l.b16 %v123
    %v243 = vunpack.c.h.b16 %v123
    %v244 = vunpack.c.l.b16 %v124
    %v245 = vunpack.c.h.b16 %v124
    %v246 = vunpack.c.l.b16 %v125
    %v247 = vunpack.c.h.b16 %v125
    %v248 = vunpack.c.l.b16 %v126
    %v249 = vunpack.c.h.b16 %v126
    %v250 = vunpack.c.l.b16 %v127
    %v251 = vunpack.c.h.b16 %v127
    %v252 = vunpack.c.l.b16 %v128
    %v253 = vunpack.c.h.b16 %v128
    %v254 = vunpack.c.l.b16 %v129
    %v255 = vunpack.c.h.b16 %v129
    %v256 = vunpack.c.l.b16 %v130
    %v257 = vunpack.c.h.b16 %v130
    %v258 = vunpack.c.l.b16 %v131
    %v259 = vunpack.c.h.b16 %v131
    %v260 = vunpack.c.l.b16 %v132
    %v261 = vunpack.c.h.b16 %v132
    %v262 = vunpack.c.l.b16 %v133
    %v263 = vunpack.c.h.b16 %v133
    %v264 = vunpack.c.l.b16 %v134
    %v265 = vunpack.c.h.b16 %v134
    %v266 = vunpack.c.l.b16 %v135
    %v267 = vunpack.c.h.b16 %v135
    %v268 = vunpack.c.l.b16 %v136
    %v269 = vunpack.c.h.b16 %v136
    %v270 = vunpack.c.l.b16 %v137
    %v271 = vunpack.c.h.b16 %v137
    %v272 = vunpack.c.l.b16 %v138
    %v273 = vunpack.c.h.b16 %v138
    %v274 = vunpack.c.l.b16 %v139
    %v275 = vunpack.c.h.b16 %v139
    %v276 = vunpack.c.l.b16 %v140
    %v277 = vunpack.c.h.b16 %v140
    %v278 = vunpack.c.l.b16 %v141
    %v279 = vunpack.c.h.b16 %v141
    %v280 = vunpack.c.l.b16 %v142
    %v281 = vunpack.c.h.b16 %v142
    %v282 = vunpack.c.l.b16 %v143
    %v283 = vunpack.c.h.b16 %v143
    %v284 = vunpack.c.l.b16 %v144
    %v285 = vunpack.c.h.b16 %v144
    %v286 = vunpack.c.l.b16 %v145
    %v287 = vunpack.c.h.b16 %v145
    %v288 = vunpack.c.l.b16 %v146
    %v289 = vunpack.c.h.b16 %v146
    %v290 = vunpack.c.l.b16 %v147
    %v291 = vunpack.c.h.b16 %v147
    %v292 = vunpack.c.l.b16 %v148
    %v293 = vunpack.c.h.b16 %v148
    %v294 = vpack.c.b16 %v204, %v198
    %v295 = vpack.c.b16 %v205, %v199
    %v296 = vpack.c.b16 %v206, %v200
    %v297 = vpack.c.b16 %v207, %v201
    %v298 = vpack.c.b16 %v208, %v202
    %v299 = vpack.c.b16 %v209, %v203
    %v300 = vpack.c.b16 %v216, %v210
    %v301 = vpack.c.b16 %v217, %v211
    %v302 = vpack.c.b16 %v218, %v212
    %v303 = vpack.c.b16 %v219, %v213
    %v304 = vpack.c.b16 %v220, %v214
    %v305 = vpack.c.b16 %v221, %v215
    %v306 = vpack.c.b16 %v228, %v222
    %v307 = vpack.c.b16 %v229, %v223
    %v308 = vpack.c.b16 %v230, %v224
    %v309 = vpack.c.b16 %v231, %v225
    %v310 = vpack.c.b16 %v232, %v226
    %v311 = vpack.c.b16 %v233, %v227
    %v312 = vpack.c.b16 %v240, %v234
    %v313 = vpack.c.b16 %v241, %v235
    %v314 = vpack.c.b16 %v242, %v236
    %v315 = vpack.c.b16 %v243, %v237
    %v316 = vpack.c.b16 %v244, %v238
    %v317 = vpack.c.b16 %v245, %v239
    %v318 = vpack.c.b16 %v252, %v246
    %v319 = vpack.c.b16 %v253, %v247
    %v320 = vpack.c.b16 %v254, %v248
    %v321 = vpack.c.b16 %v255, %v249
    %v322 = vpack.c.b16 %v256, %v250
    %v323 = vpack.c.b16 %v257, %v251
    %v324 = vpack.c.b16 %v264, %v258
    %v325 = vpack.c.b16 %v265, %v259
    %v326 = vpack.c.b16 %v266, %v260
    %v327 = vpack.c.b16 %v267, %v261
    %v328 = vpack.c.b16 %v268, %v262
    %v329 = vpack.c.b16 %v269, %v263
    %v330 = vpack.c.b16 %v276, %v270
    %v331 = vpack.c.b16 %v277, %v271
    %v332 = vpack.c.b16 %v278, %v272
    %v333 = vpack.c.b16 %v279, %v273
    %v334 = vpack.c.b16 %v280, %v274
    %v335 = vpack.c.b16 %v281, %v275
    %v336 = vpack.c.b16 %v288, %v282
    %v337 = vpack.c.b16 %v289, %v283
    %v338 = vpack.c.b16 %v290, %v284
    %v339 = vpack.c.b16 %v291, %v285
    %v340 = vpack.c.b16 %v292, %v286
    %v341 = vpack.c.b16 %v293, %v287
    %390 = vmatprep.subr.bf16.mxu0 %v337
    %391 = vmatpush1.bf16.msra.mxu0 %v336
    %392 = vmatprep.subr.bf16.mxu0 %v331
    %393 = vmatpush1.bf16.msra.mxu0 %v330
    %394 = vmatprep.subr.bf16.mxu0 %v325
    %395 = vmatpush1.bf16.msra.mxu0 %v324
    %396 = vmatprep.subr.bf16.mxu0 %v319
    %397 = vmatpush1.bf16.msra.mxu0 %v318
    %398 = vmatprep.subr.bf16.mxu0 %v313
    %399 = vmatpush1.bf16.msra.mxu0 %v312
    %400 = vmatprep.subr.bf16.mxu0 %v307
    %401 = vmatpush1.bf16.msra.mxu0 %v306
    %402 = vmatprep.subr.bf16.mxu0 %v301
    %403 = vmatpush1.bf16.msra.mxu0 %v300
    %404 = vmatprep.subr.bf16.mxu0 %v295
    %405 = vmatpush1.bf16.msra.mxu0 %v294
    %406 = vmatprep.subr.bf16.mxu0 0
    %407 = vmatpush2.bf16.msra.mxu0 0
    %408 = vmatprep.subr.bf16.mxu0 0
    %409 = vmatpush2.bf16.msra.mxu0 0
    %410 = vmatprep.subr.bf16.mxu0 0
    %411 = vmatpush2.bf16.msra.mxu0 0
    %412 = vmatprep.subr.bf16.mxu0 0
    %413 = vmatpush2.bf16.msra.mxu0 0
    %414 = vmatprep.subr.bf16.mxu0 0
    %415 = vmatpush2.bf16.msra.mxu0 0
    %416 = vmatprep.subr.bf16.mxu0 0
    %417 = vmatpush2.bf16.msra.mxu0 0
    %418 = vmatprep.subr.bf16.mxu0 0
    %419 = vmatpush2.bf16.msra.mxu0 0
    %420 = vmatprep.subr.bf16.mxu0 0
    %421 = vmatpush2.bf16.msra.mxu0 0
    %422 = vmatprep.mubr.bf16.mxu0 0
    %423 = vmatmul.mubr.bf16.gmra.mxu0 %v149
    %v424 = vpop.f32.mrf.mxu0
    %v425 = vadd.f32 0.0, %v424
    %v426 = vpop.f32.mrf.mxu0
    %v427 = vadd.f32 0.0, %v426
    %v428 = vpop.f32.mrf.mxu0
    %v429 = vadd.f32 0.0, %v428
    %v430 = vpop.f32.mrf.mxu0
    %v431 = vadd.f32 0.0, %v430
    %432 = vdwg.mxu0
    %433 = vmatprep.subr.bf16.mxu0 %v339
    %434 = vmatpush1.bf16.msra.mxu0 %v338
    %435 = vmatprep.subr.bf16.mxu0 %v333
    %436 = vmatpush1.bf16.msra.mxu0 %v332
    %437 = vmatprep.subr.bf16.mxu0 %v327
    %438 = vmatpush1.bf16.msra.mxu0 %v326
    %439 = vmatprep.subr.bf16.mxu0 %v321
    %440 = vmatpush1.bf16.msra.mxu0 %v320
    %441 = vmatprep.subr.bf16.mxu0 %v315
    %442 = vmatpush1.bf16.msra.mxu0 %v314
    %443 = vmatprep.subr.bf16.mxu0 %v309
    %444 = vmatpush1.bf16.msra.mxu0 %v308
    %445 = vmatprep.subr.bf16.mxu0 %v303
    %446 = vmatpush1.bf16.msra.mxu0 %v302
    %447 = vmatprep.subr.bf16.mxu0 %v297
    %448 = vmatpush1.bf16.msra.mxu0 %v296
    %449 = vmatprep.subr.bf16.mxu0 0
    %450 = vmatpush2.bf16.msra.mxu0 0
    %451 = vmatprep.subr.bf16.mxu0 0
    %452 = vmatpush2.bf16.msra.mxu0 0
    %453 = vmatprep.subr.bf16.mxu0 0
    %454 = vmatpush2.bf16.msra.mxu0 0
    %455 = vmatprep.subr.bf16.mxu0 0
    %456 = vmatpush2.bf16.msra.mxu0 0
    %457 = vmatprep.subr.bf16.mxu0 0
    %458 = vmatpush2.bf16.msra.mxu0 0
    %459 = vmatprep.subr.bf16.mxu0 0
    %460 = vmatpush2.bf16.msra.mxu0 0
    %461 = vmatprep.subr.bf16.mxu0 0
    %462 = vmatpush2.bf16.msra.mxu0 0
    %463 = vmatprep.subr.bf16.mxu0 0
    %464 = vmatpush2.bf16.msra.mxu0 0
    %465 = vmatprep.mubr.bf16.mxu0 0
    %466 = vmatmul.mubr.bf16.gmra.mxu0 %v149
    %v467 = vpop.f32.mrf.mxu0
    %v468 = vadd.f32 0.0, %v467
    %v469 = vpop.f32.mrf.mxu0
    %v470 = vadd.f32 0.0, %v469
    %v471 = vpop.f32.mrf.mxu0
    %v472 = vadd.f32 0.0, %v471
    %v473 = vpop.f32.mrf.mxu0
    %v474 = vadd.f32 0.0, %v473
    %475 = vdwg.mxu0
    %476 = vmatprep.subr.bf16.mxu0 %v341
    %477 = vmatpush1.bf16.msra.mxu0 %v340
    %478 = vmatprep.subr.bf16.mxu0 %v335
    %479 = vmatpush1.bf16.msra.mxu0 %v334
    %480 = vmatprep.subr.bf16.mxu0 %v329
    %481 = vmatpush1.bf16.msra.mxu0 %v328
    %482 = vmatprep.subr.bf16.mxu0 %v323
    %483 = vmatpush1.bf16.msra.mxu0 %v322
    %484 = vmatprep.subr.bf16.mxu0 %v317
    %485 = vmatpush1.bf16.msra.mxu0 %v316
    %486 = vmatprep.subr.bf16.mxu0 %v311
    %487 = vmatpush1.bf16.msra.mxu0 %v310
    %488 = vmatprep.subr.bf16.mxu0 %v305
    %489 = vmatpush1.bf16.msra.mxu0 %v304
    %490 = vmatprep.subr.bf16.mxu0 %v299
    %491 = vmatpush1.bf16.msra.mxu0 %v298
    %492 = vmatprep.subr.bf16.mxu0 0
    %493 = vmatpush2.bf16.msra.mxu0 0
    %494 = vmatprep.subr.bf16.mxu0 0
    %495 = vmatpush2.bf16.msra.mxu0 0
    %496 = vmatprep.subr.bf16.mxu0 0
    %497 = vmatpush2.bf16.msra.mxu0 0
    %498 = vmatprep.subr.bf16.mxu0 0
    %499 = vmatpush2.bf16.msra.mxu0 0
    %500 = vmatprep.subr.bf16.mxu0 0
    %501 = vmatpush2.bf16.msra.mxu0 0
    %502 = vmatprep.subr.bf16.mxu0 0
    %503 = vmatpush2.bf16.msra.mxu0 0
    %504 = vmatprep.subr.bf16.mxu0 0
    %505 = vmatpush2.bf16.msra.mxu0 0
    %506 = vmatprep.subr.bf16.mxu0 0
    %507 = vmatpush2.bf16.msra.mxu0 0
    %508 = vmatprep.mubr.bf16.mxu0 0
    %509 = vmatmul.mubr.bf16.gmra.mxu0 %v149
    %v510 = vpop.f32.mrf.mxu0
    %v511 = vadd.f32 0.0, %v510
    %v512 = vpop.f32.mrf.mxu0
    %v513 = vadd.f32 0.0, %v512
    %v514 = vpop.f32.mrf.mxu0
    %v515 = vadd.f32 0.0, %v514
    %v516 = vpop.f32.mrf.mxu0
    %v517 = vadd.f32 0.0, %v516
    %518 = vdwg.mxu0
    %v519 = vlaneseq
    %v520 = vshrl.u32 %v519, 7
    %v521 = vsub.s32 0, %v520
    %v522 = vrot.slane %v92, %v521
    %v523 = vadd.f32 %v425, %v522
    %v524 = vadd.f32 %v429, %v522
    %v525 = vlaneseq
    %v526 = vshrl.u32 %v525, 7
    %v527 = vsub.s32 2, %v526
    %v528 = vrot.slane %v92, %v527
    %v529 = vadd.f32 %v468, %v528
    %v530 = vadd.f32 %v472, %v528
    %v531 = vlaneseq
    %v532 = vshrl.u32 %v531, 7
    %v533 = vsub.s32 4, %v532
    %v534 = vrot.slane %v92, %v533
    %v535 = vadd.f32 %v511, %v534
    %v536 = vadd.f32 %v515, %v534
    %v537 = vpack.c.bf16 %v524, %v523
    %v538 = vpack.c.bf16 %v530, %v529
    %539 = vmatprep.subr.bf16.mxu0 0
    %540 = vmatpush1.bf16.xpose.msra.mxu0 0
    %541 = vmatprep.subr.bf16.mxu0 0
    %542 = vmatpush1.bf16.xpose.msra.mxu0 0
    %543 = vmatprep.subr.bf16.mxu0 0
    %544 = vmatpush1.bf16.xpose.msra.mxu0 0
    %545 = vmatprep.subr.bf16.mxu0 0
    %546 = vmatpush1.bf16.xpose.msra.mxu0 0
    %547 = vmatprep.subr.bf16.mxu0 0
    %548 = vmatpush1.bf16.xpose.msra.mxu0 0
    %549 = vmatprep.subr.bf16.mxu0 0
    %550 = vmatpush1.bf16.xpose.msra.mxu0 0
    %551 = vmatprep.subr.bf16.mxu0 0
    %552 = vmatpush1.bf16.xpose.msra.mxu0 0
    %553 = vmatprep.subr.bf16.mxu0 0
    %554 = vmatpush1.bf16.xpose.msra.mxu0 %v538
    %555 = vmatprep.subr.bf16.mxu0 0
    %556 = vmatpush2.bf16.xpose.msra.mxu0 0
    %557 = vmatprep.subr.bf16.mxu0 0
    %558 = vmatpush2.bf16.xpose.msra.mxu0 0
    %559 = vmatprep.subr.bf16.mxu0 0
    %560 = vmatpush2.bf16.xpose.msra.mxu0 0
    %561 = vmatprep.subr.bf16.mxu0 0
    %562 = vmatpush2.bf16.xpose.msra.mxu0 0
    %563 = vmatprep.subr.bf16.mxu0 0
    %564 = vmatpush2.bf16.xpose.msra.mxu0 0
    %565 = vmatprep.subr.bf16.mxu0 0
    %566 = vmatpush2.bf16.xpose.msra.mxu0 0
    %567 = vmatprep.subr.bf16.mxu0 0
    %568 = vmatpush2.bf16.xpose.msra.mxu0 0
    %569 = vmatprep.subr.bf16.mxu0 0
    %570 = vmatpush2.bf16.xpose.msra.mxu0 0
    %571 = vmatprep.mubr.bf16.mxu0 0
    %572 = vmatmul.mubr.bf16.gmra.mxu0 %v537
    %v573 = vpop.f32.mrf.mxu0
    %v574 = vadd.f32 %v94, %v573
    %v575 = vpop.f32.mrf.mxu0
    %v576 = vpop.f32.mrf.mxu0
    %v577 = vadd.f32 %v95, %v576
    %v578 = vpop.f32.mrf.mxu0
    %579 = vdwg.mxu0
    %vm580 = vcmask 130048
    %v581 = vsel %vm580, %v574, -inf
    %582 = vmax.xlane.f32.xlu0 %v581
    %v583 = vpop.xlane.xlu0 %582
    %v584 = vsel %vm580, %v577, -inf
    %585 = vmax.xlane.f32.xlu0 %v584
    %v586 = vpop.xlane.xlu0 %585
    %v587 = vsub.f32 %v574, %v583
    %v588 = vsub.f32 %v577, %v586
    %v589 = vmul.f32 %v587, 1.442695
    %v590 = vpow.pop %v589
    %v591 = vmul.f32 %v588, 1.442695
    %v592 = vpow.pop %v591
    %v593 = vsel %vm580, %v590, 0.0
    %594 = vadd.xlane.f32.xlu0 %v593
    %v595 = vpop.xlane.xlu0 %594
    %v596 = vsel %vm580, %v592, 0.0
    %597 = vadd.xlane.f32.xlu0 %v596
    %v598 = vpop.xlane.xlu0 %597
    %v599 = vrcp.pop %v595
    %v600 = vrcp.pop %v598
    %v601 = vmul.f32 %v590, %v599
    %v602 = vmul.f32 %v592, %v600
    %v603 = vpack.c.bf16 %v602, %v601
    %v604 = vpack.c.bf16 %v536, %v535
    %v606 = vsel %vm580, %v603, 0
    %608 = vmatprep.subr.bf16.mxu0 0
    %609 = vmatpush1.bf16.msra.mxu0 0
    %610 = vmatprep.subr.bf16.mxu0 0
    %611 = vmatpush1.bf16.msra.mxu0 0
    %612 = vmatprep.subr.bf16.mxu0 0
    %613 = vmatpush1.bf16.msra.mxu0 0
    %614 = vmatprep.subr.bf16.mxu0 0
    %615 = vmatpush1.bf16.msra.mxu0 0
    %616 = vmatprep.subr.bf16.mxu0 0
    %617 = vmatpush1.bf16.msra.mxu0 0
    %618 = vmatprep.subr.bf16.mxu0 0
    %619 = vmatpush1.bf16.msra.mxu0 0
    %620 = vmatprep.subr.bf16.mxu0 0
    %621 = vmatpush1.bf16.msra.mxu0 0
    %622 = vmatprep.subr.bf16.mxu0 0
    %623 = vmatpush1.bf16.msra.mxu0 %v604
    %624 = vmatprep.subr.bf16.mxu0 0
    %625 = vmatpush2.bf16.msra.mxu0 0
    %626 = vmatprep.subr.bf16.mxu0 0
    %627 = vmatpush2.bf16.msra.mxu0 0
    %628 = vmatprep.subr.bf16.mxu0 0
    %629 = vmatpush2.bf16.msra.mxu0 0
    %630 = vmatprep.subr.bf16.mxu0 0
    %631 = vmatpush2.bf16.msra.mxu0 0
    %632 = vmatprep.subr.bf16.mxu0 0
    %633 = vmatpush2.bf16.msra.mxu0 0
    %634 = vmatprep.subr.bf16.mxu0 0
    %635 = vmatpush2.bf16.msra.mxu0 0
    %636 = vmatprep.subr.bf16.mxu0 0
    %637 = vmatpush2.bf16.msra.mxu0 0
    %638 = vmatprep.subr.bf16.mxu0 0
    %639 = vmatpush2.bf16.msra.mxu0 0
    %640 = vmatprep.mubr.bf16.mxu0 0
    %641 = vmatmul.mubr.bf16.gmra.mxu0 %v606
    %v642 = vpop.f32.mrf.mxu0
    %v643 = vadd.f32 0.0, %v642
    %v644 = vpop.f32.mrf.mxu0
    %v645 = vpop.f32.mrf.mxu0
    %v646 = vadd.f32 0.0, %v645
    %v647 = vpop.f32.mrf.mxu0
    %648 = vdwg.mxu0
    %v649 = vpack.c.bf16 %v646, %v643
    %v650 = vlaneseq
    %v651 = vshrl.u32 %v650, 7
    %v652 = vsub.s32 1, %v651
    %v653 = vrot.slane %v92, %v652
    %v654 = vadd.f32 %v427, %v653
    %v655 = vadd.f32 %v431, %v653
    %v656 = vlaneseq
    %v657 = vshrl.u32 %v656, 7
    %v658 = vsub.s32 3, %v657
    %v659 = vrot.slane %v92, %v658
    %v660 = vadd.f32 %v470, %v659
    %v661 = vadd.f32 %v474, %v659
    %v662 = vlaneseq
    %v663 = vshrl.u32 %v662, 7
    %v664 = vsub.s32 5, %v663
    %v665 = vrot.slane %v92, %v664
    %v666 = vadd.f32 %v513, %v665
    %v667 = vadd.f32 %v517, %v665
    %v668 = vpack.c.bf16 %v655, %v654
    %v669 = vpack.c.bf16 %v661, %v660
    %670 = vmatprep.subr.bf16.mxu0 0
    %671 = vmatpush1.bf16.xpose.msra.mxu0 0
    %672 = vmatprep.subr.bf16.mxu0 0
    %673 = vmatpush1.bf16.xpose.msra.mxu0 0
    %674 = vmatprep.subr.bf16.mxu0 0
    %675 = vmatpush1.bf16.xpose.msra.mxu0 0
    %676 = vmatprep.subr.bf16.mxu0 0
    %677 = vmatpush1.bf16.xpose.msra.mxu0 0
    %678 = vmatprep.subr.bf16.mxu0 0
    %679 = vmatpush1.bf16.xpose.msra.mxu0 0
    %680 = vmatprep.subr.bf16.mxu0 0
    %681 = vmatpush1.bf16.xpose.msra.mxu0 0
    %682 = vmatprep.subr.bf16.mxu0 0
    %683 = vmatpush1.bf16.xpose.msra.mxu0 0
    %684 = vmatprep.subr.bf16.mxu0 0
    %685 = vmatpush1.bf16.xpose.msra.mxu0 %v669
    %686 = vmatprep.subr.bf16.mxu0 0
    %687 = vmatpush2.bf16.xpose.msra.mxu0 0
    %688 = vmatprep.subr.bf16.mxu0 0
    %689 = vmatpush2.bf16.xpose.msra.mxu0 0
    %690 = vmatprep.subr.bf16.mxu0 0
    %691 = vmatpush2.bf16.xpose.msra.mxu0 0
    %692 = vmatprep.subr.bf16.mxu0 0
    %693 = vmatpush2.bf16.xpose.msra.mxu0 0
    %694 = vmatprep.subr.bf16.mxu0 0
    %695 = vmatpush2.bf16.xpose.msra.mxu0 0
    %696 = vmatprep.subr.bf16.mxu0 0
    %697 = vmatpush2.bf16.xpose.msra.mxu0 0
    %698 = vmatprep.subr.bf16.mxu0 0
    %699 = vmatpush2.bf16.xpose.msra.mxu0 0
    %700 = vmatprep.subr.bf16.mxu0 0
    %701 = vmatpush2.bf16.xpose.msra.mxu0 0
    %702 = vmatprep.mubr.bf16.mxu0 0
    %703 = vmatmul.mubr.bf16.gmra.mxu0 %v668
    %v704 = vpop.f32.mrf.mxu0
    %v705 = vadd.f32 %v94, %v704
    %v706 = vpop.f32.mrf.mxu0
    %v707 = vpop.f32.mrf.mxu0
    %v708 = vadd.f32 %v95, %v707
    %v709 = vpop.f32.mrf.mxu0
    %710 = vdwg.mxu0
    %v711 = vsel %vm580, %v705, -inf
    %712 = vmax.xlane.f32.xlu0 %v711
    %v713 = vpop.xlane.xlu0 %712
    %v714 = vsel %vm580, %v708, -inf
    %715 = vmax.xlane.f32.xlu0 %v714
    %v716 = vpop.xlane.xlu0 %715
    %v717 = vsub.f32 %v705, %v713
    %v718 = vsub.f32 %v708, %v716
    %v719 = vmul.f32 %v717, 1.442695
    %v720 = vpow.pop %v719
    %v721 = vmul.f32 %v718, 1.442695
    %v722 = vpow.pop %v721
    %v723 = vsel %vm580, %v720, 0.0
    %724 = vadd.xlane.f32.xlu0 %v723
    %v725 = vpop.xlane.xlu0 %724
    %v726 = vsel %vm580, %v722, 0.0
    %727 = vadd.xlane.f32.xlu0 %v726
    %v728 = vpop.xlane.xlu0 %727
    %v729 = vrcp.pop %v725
    %v730 = vrcp.pop %v728
    %v731 = vmul.f32 %v720, %v729
    %v732 = vmul.f32 %v722, %v730
    %v733 = vpack.c.bf16 %v732, %v731
    %v734 = vpack.c.bf16 %v667, %v666
    %v736 = vsel %vm580, %v733, 0
    %738 = vmatprep.subr.bf16.mxu0 0
    %739 = vmatpush1.bf16.msra.mxu0 0
    %740 = vmatprep.subr.bf16.mxu0 0
    %741 = vmatpush1.bf16.msra.mxu0 0
    %742 = vmatprep.subr.bf16.mxu0 0
    %743 = vmatpush1.bf16.msra.mxu0 0
    %744 = vmatprep.subr.bf16.mxu0 0
    %745 = vmatpush1.bf16.msra.mxu0 0
    %746 = vmatprep.subr.bf16.mxu0 0
    %747 = vmatpush1.bf16.msra.mxu0 0
    %748 = vmatprep.subr.bf16.mxu0 0
    %749 = vmatpush1.bf16.msra.mxu0 0
    %750 = vmatprep.subr.bf16.mxu0 0
    %751 = vmatpush1.bf16.msra.mxu0 0
    %752 = vmatprep.subr.bf16.mxu0 0
    %753 = vmatpush1.bf16.msra.mxu0 %v734
    %754 = vmatprep.subr.bf16.mxu0 0
    %755 = vmatpush2.bf16.msra.mxu0 0
    %756 = vmatprep.subr.bf16.mxu0 0
    %757 = vmatpush2.bf16.msra.mxu0 0
    %758 = vmatprep.subr.bf16.mxu0 0
    %759 = vmatpush2.bf16.msra.mxu0 0
    %760 = vmatprep.subr.bf16.mxu0 0
    %761 = vmatpush2.bf16.msra.mxu0 0
    %762 = vmatprep.subr.bf16.mxu0 0
    %763 = vmatpush2.bf16.msra.mxu0 0
    %764 = vmatprep.subr.bf16.mxu0 0
    %765 = vmatpush2.bf16.msra.mxu0 0
    %766 = vmatprep.subr.bf16.mxu0 0
    %767 = vmatpush2.bf16.msra.mxu0 0
    %768 = vmatprep.subr.bf16.mxu0 0
    %769 = vmatpush2.bf16.msra.mxu0 0
    %770 = vmatprep.mubr.bf16.mxu0 0
    %771 = vmatmul.mubr.bf16.gmra.mxu0 %v736
    %v772 = vpop.f32.mrf.mxu0
    %v773 = vadd.f32 0.0, %v772
    %v774 = vpop.f32.mrf.mxu0
    %v775 = vpop.f32.mrf.mxu0
    %v776 = vadd.f32 0.0, %v775
    %v777 = vpop.f32.mrf.mxu0
    %778 = vdwg.mxu0
    %v779 = vpack.c.bf16 %v776, %v773
    %v780 = vld [vmem:[#allocation8] sm:$0xf]
    %v781 = vld [vmem:[#allocation8 + $0x4] sm:$0xf]
    %v782 = vld [vmem:[#allocation8 + $0x8] sm:$0xf]
    %v783 = vld [vmem:[#allocation8 + $0xc] sm:$0xf]
    %v784 = vld [vmem:[#allocation8 + $0x10] sm:$0xf]
    %v785 = vld [vmem:[#allocation8 + $0x14] sm:$0xf]
    %v786 = vld [vmem:[#allocation8 + $0x18] sm:$0xf]
    %v787 = vld [vmem:[#allocation8 + $0x1c] sm:$0xf]
    %v788 = vld [vmem:[#allocation8 + $0x20] sm:$0xf]
    %v789 = vld [vmem:[#allocation8 + $0x24] sm:$0xf]
    %v790 = vld [vmem:[#allocation8 + $0x28] sm:$0xf]
    %v791 = vld [vmem:[#allocation8 + $0x2c] sm:$0xf]
    %v792 = vld [vmem:[#allocation8 + $0x30] sm:$0xf]
    %v793 = vld [vmem:[#allocation8 + $0x34] sm:$0xf]
    %v794 = vld [vmem:[#allocation8 + $0x38] sm:$0xf]
    %v795 = vld [vmem:[#allocation8 + $0x3c] sm:$0xf]
    %v796 = vld [vmem:[#allocation8 + $0x40] sm:$0xf]
    %v797 = vld [vmem:[#allocation8 + $0x44] sm:$0xf]
    %v798 = vld [vmem:[#allocation8 + $0x48] sm:$0xf]
    %v799 = vld [vmem:[#allocation8 + $0x4c] sm:$0xf]
    %v800 = vld [vmem:[#allocation8 + $0x50] sm:$0xf]
    %v801 = vld [vmem:[#allocation8 + $0x54] sm:$0xf]
    %v802 = vld [vmem:[#allocation8 + $0x58] sm:$0xf]
    %v803 = vld [vmem:[#allocation8 + $0x5c] sm:$0xf]
    %v804 = vld [vmem:[#allocation8 + $0x60] sm:$0xf]
    %v805 = vld [vmem:[#allocation8 + $0x64] sm:$0xf]
    %v806 = vld [vmem:[#allocation8 + $0x68] sm:$0xf]
    %v807 = vld [vmem:[#allocation8 + $0x6c] sm:$0xf]
    %v808 = vld [vmem:[#allocation8 + $0x70] sm:$0xf]
    %v809 = vld [vmem:[#allocation8 + $0x74] sm:$0xf]
    %v810 = vld [vmem:[#allocation8 + $0x78] sm:$0xf]
    %v811 = vld [vmem:[#allocation8 + $0x7c] sm:$0xf]
    %v812 = vlaneseq
    %v813 = vshrl.u32 %v812, 7
    %v814 = vsub.s32 6, %v813
    %v815 = vrot.slane %v92, %v814
    %v848 = vunpack.c.l.b16 %v780
    %v849 = vunpack.c.l.b16 %v781
    %v850 = vunpack.c.l.b16 %v782
    %v851 = vunpack.c.l.b16 %v783
    %v852 = vunpack.c.l.b16 %v784
    %v853 = vunpack.c.l.b16 %v785
    %v854 = vunpack.c.l.b16 %v786
    %v855 = vunpack.c.l.b16 %v787
    %v856 = vunpack.c.l.b16 %v788
    %v857 = vunpack.c.l.b16 %v789
    %v858 = vunpack.c.l.b16 %v790
    %v859 = vunpack.c.l.b16 %v791
    %v860 = vunpack.c.l.b16 %v792
    %v861 = vunpack.c.l.b16 %v793
    %v862 = vunpack.c.l.b16 %v794
    %v863 = vunpack.c.l.b16 %v795
    %v864 = vunpack.c.l.b16 %v796
    %v865 = vunpack.c.l.b16 %v797
    %v866 = vunpack.c.l.b16 %v798
    %v867 = vunpack.c.l.b16 %v799
    %v868 = vunpack.c.l.b16 %v800
    %v869 = vunpack.c.l.b16 %v801
    %v870 = vunpack.c.l.b16 %v802
    %v871 = vunpack.c.l.b16 %v803
    %v872 = vunpack.c.l.b16 %v804
    %v873 = vunpack.c.l.b16 %v805
    %v874 = vunpack.c.l.b16 %v806
    %v875 = vunpack.c.l.b16 %v807
    %v876 = vunpack.c.l.b16 %v808
    %v877 = vunpack.c.l.b16 %v809
    %v878 = vunpack.c.l.b16 %v810
    %v879 = vunpack.c.l.b16 %v811
    %v880 = vpack.c.b16 %v849, %v848
    %v881 = vpack.c.b16 %v851, %v850
    %v882 = vpack.c.b16 %v853, %v852
    %v883 = vpack.c.b16 %v855, %v854
    %v884 = vpack.c.b16 %v857, %v856
    %v885 = vpack.c.b16 %v859, %v858
    %v886 = vpack.c.b16 %v861, %v860
    %v887 = vpack.c.b16 %v863, %v862
    %v888 = vpack.c.b16 %v865, %v864
    %v889 = vpack.c.b16 %v867, %v866
    %v890 = vpack.c.b16 %v869, %v868
    %v891 = vpack.c.b16 %v871, %v870
    %v892 = vpack.c.b16 %v873, %v872
    %v893 = vpack.c.b16 %v875, %v874
    %v894 = vpack.c.b16 %v877, %v876
    %v895 = vpack.c.b16 %v879, %v878
    %912 = vmatprep.subr.bf16.mxu0 0
    %913 = vmatpush1.bf16.msra.mxu0 %v887
    %914 = vmatprep.subr.bf16.mxu0 0
    %915 = vmatpush1.bf16.msra.mxu0 %v886
    %916 = vmatprep.subr.bf16.mxu0 0
    %917 = vmatpush1.bf16.msra.mxu0 %v885
    %918 = vmatprep.subr.bf16.mxu0 0
    %919 = vmatpush1.bf16.msra.mxu0 %v884
    %920 = vmatprep.subr.bf16.mxu0 0
    %921 = vmatpush1.bf16.msra.mxu0 %v883
    %922 = vmatprep.subr.bf16.mxu0 0
    %923 = vmatpush1.bf16.msra.mxu0 %v882
    %924 = vmatprep.subr.bf16.mxu0 0
    %925 = vmatpush1.bf16.msra.mxu0 %v881
    %926 = vmatprep.subr.bf16.mxu0 0
    %927 = vmatpush1.bf16.msra.mxu0 %v880
    %928 = vmatprep.subr.bf16.mxu0 0
    %929 = vmatpush2.bf16.msra.mxu0 %v895
    %930 = vmatprep.subr.bf16.mxu0 0
    %931 = vmatpush2.bf16.msra.mxu0 %v894
    %932 = vmatprep.subr.bf16.mxu0 0
    %933 = vmatpush2.bf16.msra.mxu0 %v893
    %934 = vmatprep.subr.bf16.mxu0 0
    %935 = vmatpush2.bf16.msra.mxu0 %v892
    %936 = vmatprep.subr.bf16.mxu0 0
    %937 = vmatpush2.bf16.msra.mxu0 %v891
    %938 = vmatprep.subr.bf16.mxu0 0
    %939 = vmatpush2.bf16.msra.mxu0 %v890
    %940 = vmatprep.subr.bf16.mxu0 0
    %941 = vmatpush2.bf16.msra.mxu0 %v889
    %942 = vmatprep.subr.bf16.mxu0 0
    %943 = vmatpush2.bf16.msra.mxu0 %v888
    %944 = vmatprep.mubr.bf16.mxu0 %v779
    %945 = vmatmul.mubr.bf16.gmra.mxu0 %v649
    %v946 = vpop.f32.mrf.mxu0
    %v947 = vadd.f32 %v815, %v946
    %v948 = vpop.f32.mrf.mxu0
    %v949 = vpop.f32.mrf.mxu0
    %v950 = vadd.f32 %v815, %v949
    %v951 = vpop.f32.mrf.mxu0
    %952 = vdwg.mxu0
    %v953 = vadd.f32 %v90, %v947
    %v954 = vadd.f32 %v91, %v950
    %955 = vadd.xlane.f32.xlu0 %v953
    %v956 = vpop.xlane.xlu0 %955
    %957 = vadd.xlane.f32.xlu0 %v954
    %v958 = vpop.xlane.xlu0 %957
    %v959 = vmul.f32 %v956, 0.03125
    %v960 = vmul.f32 %v958, 0.03125
    %v961 = vsub.f32 %v953, %v959
    %v962 = vsub.f32 %v954, %v960
    %v963 = vmul.f32 %v961, %v100
    %v964 = vmul.f32 %v962, %v100
    %v965 = vmul.f32 %v963, %v963
    %v966 = vmul.f32 %v964, %v964
    %967 = vadd.xlane.f32.xlu0 %v965
    %v968 = vpop.xlane.xlu0 %967
    %969 = vadd.xlane.f32.xlu0 %v966
    %v970 = vpop.xlane.xlu0 %969
    %v971 = vmul.f32 %v968, 0.03125
    %v972 = vmul.f32 %v970, 0.03125
    %v973 = vadd.f32 %v971, 1e-12
    %v974 = vadd.f32 %v972, 1e-12
    %v975 = vrsqrt.pop %v973
    %v976 = vrsqrt.pop %v974
    %v977 = vmul.f32 %v961, %v975
    %v978 = vmul.f32 %v962, %v976
    %v979 = vlaneseq
    %v980 = vshrl.u32 %v979, 7
    %v981 = vsub.s32 7, %v980
    %v982 = vrot.slane %v92, %v981
    %v983 = vmul.f32 %v977, %v982
    %v984 = vmul.f32 %v978, %v982
    %v985 = vlaneseq
    %v986 = vshrl.u32 %v985, 7
    %v987 = vsub.s32 0, %v986
    %v988 = vrot.slane %v93, %v987
    %v989 = vadd.f32 %v983, %v988
    %v990 = vadd.f32 %v984, %v988
    %v991 = vld [vmem:[#allocation7 + $0x18] sm:$0xf]
    %v992 = vld [vmem:[#allocation7 + $0x40] sm:$0xf]
    %v993 = vld [vmem:[#allocation7 + $0x68] sm:$0xf]
    %v994 = vld [vmem:[#allocation7 + $0x90] sm:$0xf]
    %v995 = vld [vmem:[#allocation7 + $0xb8] sm:$0xf]
    %v996 = vld [vmem:[#allocation7 + $0xe0] sm:$0xf]
    %v997 = vld [vmem:[#allocation7 + $0x108] sm:$0xf]
    %v998 = vld [vmem:[#allocation7 + $0x130] sm:$0xf]
    %v999 = vld [vmem:[#allocation7 + $0x158] sm:$0xf]
    %v1000 = vld [vmem:[#allocation7 + $0x180] sm:$0xf]
    %v1001 = vld [vmem:[#allocation7 + $0x1a8] sm:$0xf]
    %v1002 = vld [vmem:[#allocation7 + $0x1d0] sm:$0xf]
    %v1003 = vld [vmem:[#allocation7 + $0x1f8] sm:$0xf]
    %v1004 = vld [vmem:[#allocation7 + $0x220] sm:$0xf]
    %v1005 = vld [vmem:[#allocation7 + $0x248] sm:$0xf]
    %v1006 = vld [vmem:[#allocation7 + $0x270] sm:$0xf]
    %v1007 = vld [vmem:[#allocation7 + $0x1c] sm:$0xf]
    %v1008 = vld [vmem:[#allocation7 + $0x44] sm:$0xf]
    %v1009 = vld [vmem:[#allocation7 + $0x6c] sm:$0xf]
    %v1010 = vld [vmem:[#allocation7 + $0x94] sm:$0xf]
    %v1011 = vld [vmem:[#allocation7 + $0xbc] sm:$0xf]
    %v1012 = vld [vmem:[#allocation7 + $0xe4] sm:$0xf]
    %v1013 = vld [vmem:[#allocation7 + $0x10c] sm:$0xf]
    %v1014 = vld [vmem:[#allocation7 + $0x134] sm:$0xf]
    %v1015 = vld [vmem:[#allocation7 + $0x15c] sm:$0xf]
    %v1016 = vld [vmem:[#allocation7 + $0x184] sm:$0xf]
    %v1017 = vld [vmem:[#allocation7 + $0x1ac] sm:$0xf]
    %v1018 = vld [vmem:[#allocation7 + $0x1d4] sm:$0xf]
    %v1019 = vld [vmem:[#allocation7 + $0x1fc] sm:$0xf]
    %v1020 = vld [vmem:[#allocation7 + $0x224] sm:$0xf]
    %v1021 = vld [vmem:[#allocation7 + $0x24c] sm:$0xf]
    %v1022 = vld [vmem:[#allocation7 + $0x274] sm:$0xf]
    %v1023 = vpack.c.bf16 %v990, %v989
    %v1024 = vlaneseq
    %v1025 = vshrl.u32 %v1024, 7
    %v1026 = vsub.s32 1, %v1025
    %v1027 = vrot.slane %v93, %v1026
    %v1044 = vunpack.c.l.b16 %v991
    %v1045 = vunpack.c.l.b16 %v992
    %v1046 = vunpack.c.l.b16 %v993
    %v1047 = vunpack.c.l.b16 %v994
    %v1048 = vunpack.c.l.b16 %v995
    %v1049 = vunpack.c.l.b16 %v996
    %v1050 = vunpack.c.l.b16 %v997
    %v1051 = vunpack.c.l.b16 %v998
    %v1052 = vunpack.c.l.b16 %v999
    %v1053 = vunpack.c.l.b16 %v1000
    %v1054 = vunpack.c.l.b16 %v1001
    %v1055 = vunpack.c.l.b16 %v1002
    %v1056 = vunpack.c.l.b16 %v1003
    %v1057 = vunpack.c.l.b16 %v1004
    %v1058 = vunpack.c.l.b16 %v1005
    %v1059 = vunpack.c.l.b16 %v1006
    %v1060 = vpack.c.b16 %v1045, %v1044
    %v1061 = vpack.c.b16 %v1047, %v1046
    %v1062 = vpack.c.b16 %v1049, %v1048
    %v1063 = vpack.c.b16 %v1051, %v1050
    %v1064 = vpack.c.b16 %v1053, %v1052
    %v1065 = vpack.c.b16 %v1055, %v1054
    %v1066 = vpack.c.b16 %v1057, %v1056
    %v1067 = vpack.c.b16 %v1059, %v1058
    %1076 = vmatprep.subr.bf16.mxu0 0
    %1077 = vmatpush1.bf16.msra.mxu0 %v1067
    %1078 = vmatprep.subr.bf16.mxu0 0
    %1079 = vmatpush1.bf16.msra.mxu0 %v1066
    %1080 = vmatprep.subr.bf16.mxu0 0
    %1081 = vmatpush1.bf16.msra.mxu0 %v1065
    %1082 = vmatprep.subr.bf16.mxu0 0
    %1083 = vmatpush1.bf16.msra.mxu0 %v1064
    %1084 = vmatprep.subr.bf16.mxu0 0
    %1085 = vmatpush1.bf16.msra.mxu0 %v1063
    %1086 = vmatprep.subr.bf16.mxu0 0
    %1087 = vmatpush1.bf16.msra.mxu0 %v1062
    %1088 = vmatprep.subr.bf16.mxu0 0
    %1089 = vmatpush1.bf16.msra.mxu0 %v1061
    %1090 = vmatprep.subr.bf16.mxu0 0
    %1091 = vmatpush1.bf16.msra.mxu0 %v1060
    %1092 = vmatprep.subr.bf16.mxu0 0
    %1093 = vmatpush2.bf16.msra.mxu0 0
    %1094 = vmatprep.subr.bf16.mxu0 0
    %1095 = vmatpush2.bf16.msra.mxu0 0
    %1096 = vmatprep.subr.bf16.mxu0 0
    %1097 = vmatpush2.bf16.msra.mxu0 0
    %1098 = vmatprep.subr.bf16.mxu0 0
    %1099 = vmatpush2.bf16.msra.mxu0 0
    %1100 = vmatprep.subr.bf16.mxu0 0
    %1101 = vmatpush2.bf16.msra.mxu0 0
    %1102 = vmatprep.subr.bf16.mxu0 0
    %1103 = vmatpush2.bf16.msra.mxu0 0
    %1104 = vmatprep.subr.bf16.mxu0 0
    %1105 = vmatpush2.bf16.msra.mxu0 0
    %1106 = vmatprep.subr.bf16.mxu0 0
    %1107 = vmatpush2.bf16.msra.mxu0 0
    %1108 = vmatprep.mubr.bf16.mxu0 0
    %1109 = vmatmul.mubr.bf16.gmra.mxu0 %v1023
    %v1110 = vpop.f32.mrf.mxu0
    %v1111 = vadd.f32 %v1027, %v1110
    %v1112 = vpop.f32.mrf.mxu0
    %v1113 = vpop.f32.mrf.mxu0
    %v1114 = vadd.f32 %v1027, %v1113
    %v1115 = vpop.f32.mrf.mxu0
    %1116 = vdwg.mxu0
    %v1117 = vmul.f32 %v1111, %v1111
    %v1118 = vmul.f32 %v1114, %v1114
    %v1119 = vmul.f32 %v1111, %v1117
    %v1120 = vmul.f32 %v1114, %v1118
    %v1121 = vmul.f32 %v1119, 0.044715
    %v1122 = vmul.f32 %v1120, 0.044715
    %v1123 = vadd.f32 %v1111, %v1121
    %v1124 = vadd.f32 %v1114, %v1122
    %v1125 = vmul.f32 %v1123, 0.7978846
    %v1126 = vmul.f32 %v1124, 0.7978846
    %v1127 = vtanh.pop %v1125
    %v1128 = vtanh.pop %v1126
    %v1129 = vadd.f32 %v1127, 1.0
    %v1130 = vadd.f32 %v1128, 1.0
    %v1131 = vmul.f32 %v1129, 0.5
    %v1132 = vmul.f32 %v1130, 0.5
    %v1133 = vmul.f32 %v1111, %v1131
    %v1134 = vmul.f32 %v1114, %v1132
    %v1135 = vpack.c.bf16 %v1134, %v1133
    %v1136 = vlaneseq
    %v1137 = vshrl.u32 %v1136, 7
    %v1138 = vsub.s32 2, %v1137
    %v1139 = vrot.slane %v93, %v1138
    %v1156 = vunpack.c.l.b16 %v1007
    %v1157 = vunpack.c.l.b16 %v1008
    %v1158 = vunpack.c.l.b16 %v1009
    %v1159 = vunpack.c.l.b16 %v1010
    %v1160 = vunpack.c.l.b16 %v1011
    %v1161 = vunpack.c.l.b16 %v1012
    %v1162 = vunpack.c.l.b16 %v1013
    %v1163 = vunpack.c.l.b16 %v1014
    %v1164 = vunpack.c.l.b16 %v1015
    %v1165 = vunpack.c.l.b16 %v1016
    %v1166 = vunpack.c.l.b16 %v1017
    %v1167 = vunpack.c.l.b16 %v1018
    %v1168 = vunpack.c.l.b16 %v1019
    %v1169 = vunpack.c.l.b16 %v1020
    %v1170 = vunpack.c.l.b16 %v1021
    %v1171 = vunpack.c.l.b16 %v1022
    %v1172 = vpack.c.b16 %v1157, %v1156
    %v1173 = vpack.c.b16 %v1159, %v1158
    %v1174 = vpack.c.b16 %v1161, %v1160
    %v1175 = vpack.c.b16 %v1163, %v1162
    %v1176 = vpack.c.b16 %v1165, %v1164
    %v1177 = vpack.c.b16 %v1167, %v1166
    %v1178 = vpack.c.b16 %v1169, %v1168
    %v1179 = vpack.c.b16 %v1171, %v1170
    %1188 = vmatprep.subr.bf16.mxu0 0
    %1189 = vmatpush1.bf16.msra.mxu0 %v1179
    %1190 = vmatprep.subr.bf16.mxu0 0
    %1191 = vmatpush1.bf16.msra.mxu0 %v1178
    %1192 = vmatprep.subr.bf16.mxu0 0
    %1193 = vmatpush1.bf16.msra.mxu0 %v1177
    %1194 = vmatprep.subr.bf16.mxu0 0
    %1195 = vmatpush1.bf16.msra.mxu0 %v1176
    %1196 = vmatprep.subr.bf16.mxu0 0
    %1197 = vmatpush1.bf16.msra.mxu0 %v1175
    %1198 = vmatprep.subr.bf16.mxu0 0
    %1199 = vmatpush1.bf16.msra.mxu0 %v1174
    %1200 = vmatprep.subr.bf16.mxu0 0
    %1201 = vmatpush1.bf16.msra.mxu0 %v1173
    %1202 = vmatprep.subr.bf16.mxu0 0
    %1203 = vmatpush1.bf16.msra.mxu0 %v1172
    %1204 = vmatprep.subr.bf16.mxu0 0
    %1205 = vmatpush2.bf16.msra.mxu0 0
    %1206 = vmatprep.subr.bf16.mxu0 0
    %1207 = vmatpush2.bf16.msra.mxu0 0
    %1208 = vmatprep.subr.bf16.mxu0 0
    %1209 = vmatpush2.bf16.msra.mxu0 0
    %1210 = vmatprep.subr.bf16.mxu0 0
    %1211 = vmatpush2.bf16.msra.mxu0 0
    %1212 = vmatprep.subr.bf16.mxu0 0
    %1213 = vmatpush2.bf16.msra.mxu0 0
    %1214 = vmatprep.subr.bf16.mxu0 0
    %1215 = vmatpush2.bf16.msra.mxu0 0
    %1216 = vmatprep.subr.bf16.mxu0 0
    %1217 = vmatpush2.bf16.msra.mxu0 0
    %1218 = vmatprep.subr.bf16.mxu0 0
    %1219 = vmatpush2.bf16.msra.mxu0 0
    %1220 = vmatprep.mubr.bf16.mxu0 0
    %1221 = vmatmul.mubr.bf16.gmra.mxu0 %v1135
    %v1222 = vpop.f32.mrf.mxu0
    %v1223 = vadd.f32 %v1139, %v1222
    %v1224 = vpop.f32.mrf.mxu0
    %v1225 = vpop.f32.mrf.mxu0
    %v1226 = vadd.f32 %v1139, %v1225
    %v1227 = vpop.f32.mrf.mxu0
    %1228 = vdwg.mxu0
    %v1229 = vadd.f32 %v989, %v1223
    %v1230 = vadd.f32 %v990, %v1226
    %1231 = vadd.xlane.f32.xlu0 %v1229
    %v1232 = vpop.xlane.xlu0 %1231
    %1233 = vadd.xlane.f32.xlu0 %v1230
    %v1234 = vpop.xlane.xlu0 %1233
    %v1235 = vmul.f32 %v1232, 0.03125
    %v1236 = vmul.f32 %v1234, 0.03125
    %v1237 = vsub.f32 %v1229, %v1235
    %v1238 = vsub.f32 %v1230, %v1236
    %v1239 = vmul.f32 %v1237, %v100
    %v1240 = vmul.f32 %v1238, %v100
    %v1241 = vmul.f32 %v1239, %v1239
    %v1242 = vmul.f32 %v1240, %v1240
    %1243 = vadd.xlane.f32.xlu0 %v1241
    %v1244 = vpop.xlane.xlu0 %1243
    %1245 = vadd.xlane.f32.xlu0 %v1242
    %v1246 = vpop.xlane.xlu0 %1245
    %v1247 = vmul.f32 %v1244, 0.03125
    %v1248 = vmul.f32 %v1246, 0.03125
    %v1249 = vadd.f32 %v1247, 1e-12
    %v1250 = vadd.f32 %v1248, 1e-12
    %v1251 = vrsqrt.pop %v1249
    %v1252 = vrsqrt.pop %v1250
    %v1253 = vmul.f32 %v1237, %v1251
    %v1254 = vmul.f32 %v1238, %v1252
    %v1255 = vlaneseq
    %v1256 = vshrl.u32 %v1255, 7
    %v1257 = vsub.s32 3, %v1256
    %v1258 = vrot.slane %v93, %v1257
    %v1259 = vmul.f32 %v1253, %v1258
    %v1260 = vmul.f32 %v1254, %v1258
    %v1261 = vlaneseq
    %v1262 = vshrl.u32 %v1261, 7
    %v1263 = vsub.s32 4, %v1262
    %v1264 = vrot.slane %v93, %v1263
    %v1265 = vadd.f32 %v1259, %v1264
    %v1266 = vadd.f32 %v1260, %v1264
    %v1267 = vld [vmem:[#allocation7 + $0x20] sm:$0xf]
    %v1268 = vld [vmem:[#allocation7 + $0x48] sm:$0xf]
    %v1269 = vld [vmem:[#allocation7 + $0x70] sm:$0xf]
    %v1270 = vld [vmem:[#allocation7 + $0x98] sm:$0xf]
    %v1271 = vld [vmem:[#allocation7 + $0xc0] sm:$0xf]
    %v1272 = vld [vmem:[#allocation7 + $0xe8] sm:$0xf]
    %v1273 = vld [vmem:[#allocation7 + $0x110] sm:$0xf]
    %v1274 = vld [vmem:[#allocation7 + $0x138] sm:$0xf]
    %v1275 = vld [vmem:[#allocation7 + $0x160] sm:$0xf]
    %v1276 = vld [vmem:[#allocation7 + $0x188] sm:$0xf]
    %v1277 = vld [vmem:[#allocation7 + $0x1b0] sm:$0xf]
    %v1278 = vld [vmem:[#allocation7 + $0x1d8] sm:$0xf]
    %v1279 = vld [vmem:[#allocation7 + $0x200] sm:$0xf]
    %v1280 = vld [vmem:[#allocation7 + $0x228] sm:$0xf]
    %v1281 = vld [vmem:[#allocation7 + $0x250] sm:$0xf]
    %v1282 = vld [vmem:[#allocation7 + $0x278] sm:$0xf]
    %v1283 = vld [vmem:[#allocation7 + $0x24] sm:$0xf]
    %v1284 = vld [vmem:[#allocation7 + $0x4c] sm:$0xf]
    %v1285 = vld [vmem:[#allocation7 + $0x74] sm:$0xf]
    %v1286 = vld [vmem:[#allocation7 + $0x9c] sm:$0xf]
    %v1287 = vld [vmem:[#allocation7 + $0xc4] sm:$0xf]
    %v1288 = vld [vmem:[#allocation7 + $0xec] sm:$0xf]
    %v1289 = vld [vmem:[#allocation7 + $0x114] sm:$0xf]
    %v1290 = vld [vmem:[#allocation7 + $0x13c] sm:$0xf]
    %v1291 = vld [vmem:[#allocation7 + $0x164] sm:$0xf]
    %v1292 = vld [vmem:[#allocation7 + $0x18c] sm:$0xf]
    %v1293 = vld [vmem:[#allocation7 + $0x1b4] sm:$0xf]
    %v1294 = vld [vmem:[#allocation7 + $0x1dc] sm:$0xf]
    %v1295 = vld [vmem:[#allocation7 + $0x204] sm:$0xf]
    %v1296 = vld [vmem:[#allocation7 + $0x22c] sm:$0xf]
    %v1297 = vld [vmem:[#allocation7 + $0x254] sm:$0xf]
    %v1298 = vld [vmem:[#allocation7 + $0x27c] sm:$0xf]
    %v1299 = vpack.c.bf16 %v1266, %v1265
    %v1300 = vlaneseq
    %v1301 = vshrl.u32 %v1300, 7
    %v1302 = vsub.s32 5, %v1301
    %v1303 = vrot.slane %v93, %v1302
    %v1320 = vunpack.c.l.b16 %v1267
    %v1321 = vunpack.c.l.b16 %v1268
    %v1322 = vunpack.c.l.b16 %v1269
    %v1323 = vunpack.c.l.b16 %v1270
    %v1324 = vunpack.c.l.b16 %v1271
    %v1325 = vunpack.c.l.b16 %v1272
    %v1326 = vunpack.c.l.b16 %v1273
    %v1327 = vunpack.c.l.b16 %v1274
    %v1328 = vunpack.c.l.b16 %v1275
    %v1329 = vunpack.c.l.b16 %v1276
    %v1330 = vunpack.c.l.b16 %v1277
    %v1331 = vunpack.c.l.b16 %v1278
    %v1332 = vunpack.c.l.b16 %v1279
    %v1333 = vunpack.c.l.b16 %v1280
    %v1334 = vunpack.c.l.b16 %v1281
    %v1335 = vunpack.c.l.b16 %v1282
    %v1336 = vpack.c.b16 %v1321, %v1320
    %v1337 = vpack.c.b16 %v1323, %v1322
    %v1338 = vpack.c.b16 %v1325, %v1324
    %v1339 = vpack.c.b16 %v1327, %v1326
    %v1340 = vpack.c.b16 %v1329, %v1328
    %v1341 = vpack.c.b16 %v1331, %v1330
    %v1342 = vpack.c.b16 %v1333, %v1332
    %v1343 = vpack.c.b16 %v1335, %v1334
    %1352 = vmatprep.subr.bf16.mxu0 0
    %1353 = vmatpush1.bf16.msra.mxu0 %v1343
    %1354 = vmatprep.subr.bf16.mxu0 0
    %1355 = vmatpush1.bf16.msra.mxu0 %v1342
    %1356 = vmatprep.subr.bf16.mxu0 0
    %1357 = vmatpush1.bf16.msra.mxu0 %v1341
    %1358 = vmatprep.subr.bf16.mxu0 0
    %1359 = vmatpush1.bf16.msra.mxu0 %v1340
    %1360 = vmatprep.subr.bf16.mxu0 0
    %1361 = vmatpush1.bf16.msra.mxu0 %v1339
    %1362 = vmatprep.subr.bf16.mxu0 0
    %1363 = vmatpush1.bf16.msra.mxu0 %v1338
    %1364 = vmatprep.subr.bf16.mxu0 0
    %1365 = vmatpush1.bf16.msra.mxu0 %v1337
    %1366 = vmatprep.subr.bf16.mxu0 0
    %1367 = vmatpush1.bf16.msra.mxu0 %v1336
    %1368 = vmatprep.subr.bf16.mxu0 0
    %1369 = vmatpush2.bf16.msra.mxu0 0
    %1370 = vmatprep.subr.bf16.mxu0 0
    %1371 = vmatpush2.bf16.msra.mxu0 0
    %1372 = vmatprep.subr.bf16.mxu0 0
    %1373 = vmatpush2.bf16.msra.mxu0 0
    %1374 = vmatprep.subr.bf16.mxu0 0
    %1375 = vmatpush2.bf16.msra.mxu0 0
    %1376 = vmatprep.subr.bf16.mxu0 0
    %1377 = vmatpush2.bf16.msra.mxu0 0
    %1378 = vmatprep.subr.bf16.mxu0 0
    %1379 = vmatpush2.bf16.msra.mxu0 0
    %1380 = vmatprep.subr.bf16.mxu0 0
    %1381 = vmatpush2.bf16.msra.mxu0 0
    %1382 = vmatprep.subr.bf16.mxu0 0
    %1383 = vmatpush2.bf16.msra.mxu0 0
    %1384 = vmatprep.mubr.bf16.mxu0 0
    %1385 = vmatmul.mubr.bf16.gmra.mxu0 %v1299
    %v1386 = vpop.f32.mrf.mxu0
    %v1387 = vadd.f32 %v1303, %v1386
    %v1388 = vpop.f32.mrf.mxu0
    %v1389 = vpop.f32.mrf.mxu0
    %v1390 = vadd.f32 %v1303, %v1389
    %v1391 = vpop.f32.mrf.mxu0
    %1392 = vdwg.mxu0
    %v1393 = vtanh.pop %v1387
    %v1394 = vtanh.pop %v1390
    %v1395 = vpack.c.bf16 %v1394, %v1393
    %v1396 = vlaneseq
    %v1397 = vshrl.u32 %v1396, 7
    %v1398 = vsub.s32 6, %v1397
    %v1399 = vrot.slane %v93, %v1398
    %v1416 = vunpack.c.l.b16 %v1283
    %v1417 = vunpack.c.l.b16 %v1284
    %v1418 = vunpack.c.l.b16 %v1285
    %v1419 = vunpack.c.l.b16 %v1286
    %v1420 = vunpack.c.l.b16 %v1287
    %v1421 = vunpack.c.l.b16 %v1288
    %v1422 = vunpack.c.l.b16 %v1289
    %v1423 = vunpack.c.l.b16 %v1290
    %v1424 = vunpack.c.l.b16 %v1291
    %v1425 = vunpack.c.l.b16 %v1292
    %v1426 = vunpack.c.l.b16 %v1293
    %v1427 = vunpack.c.l.b16 %v1294
    %v1428 = vunpack.c.l.b16 %v1295
    %v1429 = vunpack.c.l.b16 %v1296
    %v1430 = vunpack.c.l.b16 %v1297
    %v1431 = vunpack.c.l.b16 %v1298
    %v1432 = vpack.c.b16 %v1417, %v1416
    %v1433 = vpack.c.b16 %v1419, %v1418
    %v1434 = vpack.c.b16 %v1421, %v1420
    %v1435 = vpack.c.b16 %v1423, %v1422
    %v1436 = vpack.c.b16 %v1425, %v1424
    %v1437 = vpack.c.b16 %v1427, %v1426
    %v1438 = vpack.c.b16 %v1429, %v1428
    %v1439 = vpack.c.b16 %v1431, %v1430
    %1448 = vmatprep.subr.bf16.mxu0 0
    %1449 = vmatpush1.bf16.msra.mxu0 %v1439
    %1450 = vmatprep.subr.bf16.mxu0 0
    %1451 = vmatpush1.bf16.msra.mxu0 %v1438
    %1452 = vmatprep.subr.bf16.mxu0 0
    %1453 = vmatpush1.bf16.msra.mxu0 %v1437
    %1454 = vmatprep.subr.bf16.mxu0 0
    %1455 = vmatpush1.bf16.msra.mxu0 %v1436
    %1456 = vmatprep.subr.bf16.mxu0 0
    %1457 = vmatpush1.bf16.msra.mxu0 %v1435
    %1458 = vmatprep.subr.bf16.mxu0 0
    %1459 = vmatpush1.bf16.msra.mxu0 %v1434
    %1460 = vmatprep.subr.bf16.mxu0 0
    %1461 = vmatpush1.bf16.msra.mxu0 %v1433
    %1462 = vmatprep.subr.bf16.mxu0 0
    %1463 = vmatpush1.bf16.msra.mxu0 %v1432
    %1464 = vmatprep.subr.bf16.mxu0 0
    %1465 = vmatpush2.bf16.msra.mxu0 0
    %1466 = vmatprep.subr.bf16.mxu0 0
    %1467 = vmatpush2.bf16.msra.mxu0 0
    %1468 = vmatprep.subr.bf16.mxu0 0
    %1469 = vmatpush2.bf16.msra.mxu0 0
    %1470 = vmatprep.subr.bf16.mxu0 0
    %1471 = vmatpush2.bf16.msra.mxu0 0
    %1472 = vmatprep.subr.bf16.mxu0 0
    %1473 = vmatpush2.bf16.msra.mxu0 0
    %1474 = vmatprep.subr.bf16.mxu0 0
    %1475 = vmatpush2.bf16.msra.mxu0 0
    %1476 = vmatprep.subr.bf16.mxu0 0
    %1477 = vmatpush2.bf16.msra.mxu0 0
    %1478 = vmatprep.subr.bf16.mxu0 0
    %1479 = vmatpush2.bf16.msra.mxu0 0
    %1480 = vmatprep.mubr.bf16.mxu0 0
    %1481 = vmatmul.mubr.bf16.gmra.mxu0 %v1395
    %v1482 = vpop.f32.mrf.mxu0
    %v1483 = vadd.f32 %v1399, %v1482
    %v1484 = vpop.f32.mrf.mxu0
    %v1485 = vpop.f32.mrf.mxu0
    %v1486 = vadd.f32 %v1399, %v1485
    %v1487 = vpop.f32.mrf.mxu0
    %1488 = vdwg.mxu0
    %1489 = vst [vmem:[#allocation11] sm:$0xff] %v1483
    %1490 = vst [vmem:[#allocation11 + $0x8] sm:$0xff] %v1486
    // Predicated region
    $region42: #{tpu_custom_call.1} parent=1 // pred_check
      _
    $region43: #{tpu_custom_call.1} parent=1 // pred_check_branch
      %1492 = sbr.rel (0) target = $region45
    $region44: #{tpu_custom_call.1} parent=1 // pred_region
      %s1494 = ssub.s32 256, 256
      %1495 = vsyncadd [#allocation4], %s1494
      %s1496 = sshll.u32 [#allocation11], 4
      %s1497 = int_to_ptr.vmem [resolvable:$true] %s1496
      %1502 = dma.vmem_to_hbm [thread:$0]  %s1497, 256, %s5, [#allocation4], 128, 128, 8
    $region45: #{tpu_custom_call.1} parent=1 // pred_fallthru
      _
    // Predicated region
    $region46: #{tpu_custom_call.1} parent=1 // pred_check
      _
    $region47: #{tpu_custom_call.1} parent=1 // pred_check_branch
      %1504 = sbr.rel (0) target = $region49
    $region48: #{tpu_custom_call.1} parent=1 // pred_region
      %1505 = dma.done [#allocation4], 256
    $region49: #{tpu_custom_call.1} parent=1 // pred_fallthru
      _
    %1506 = vsyncpa [#allocation3], 1
    %1507 = vsyncpa [#allocation6], 1
    %1508 = vsyncpa [#allocation9], 1
    %1509 = vsyncpa [#allocation4], 1

</llo_original>
